<compile_context>
chip_gen: v6e
topology: v6e:2x2x1
jax: 0.10.0
libtpu: 0.0.40
codegen_flags: <defaults>
</compile_context>

<pallas_src>
import functools
import math

import jax
import jax.numpy as jnp
from jax.experimental import pallas as pl
from jax.experimental.pallas import tpu as pltpu


def _round_up(x: int, m: int) -> int:
    return ((x + m - 1) // m) * m


def _policy_kernel(x_ref, w1_ref, b1_ref, w2_ref, b2_ref, w3_ref, b3_ref,
                   out_ref, *, action_limit):
    """Fused MLP forward on one lane-packed batch tile.

    x_ref:  (TB, PACK*obs_dim)  f32, cast to bf16 in-kernel.
    w*_ref: block-diagonal bf16 weights (VMEM-resident across all grid steps).
    b*_ref: tiled f32 biases.
    out_ref:(TB, PACK*action_dim) bf16, lane-dense (multiple of 128 lanes).
    """
    x = x_ref[...].astype(jnp.bfloat16)

    # Layer 1: Linear + ReLU
    h = jnp.dot(x, w1_ref[...], preferred_element_type=jnp.float32) + b1_ref[...]
    h = jnp.maximum(h, 0.0)

    # Layer 2: Linear + ReLU
    h = jnp.dot(h.astype(jnp.bfloat16), w2_ref[...],
                preferred_element_type=jnp.float32) + b2_ref[...]
    h = jnp.maximum(h, 0.0)

    # Output layer: Linear + Tanh, then action_limit scaling
    o = jnp.dot(h.astype(jnp.bfloat16), w3_ref[...],
                preferred_element_type=jnp.float32) + b3_ref[...]
    out_ref[...] = (action_limit * jnp.tanh(o)).astype(out_ref.dtype)


def prepare_packed_params(params, pack):
    """Build block-diagonal bf16 weights + lane-tiled f32 biases (do this ONCE).

    Each weight (d_in, d_out) becomes kron(I_pack, W) of shape (pack*d_in, pack*d_out):
    block-diagonal, so `pack` independent batch rows packed along lanes each see
    their own copy of the MLP.  Zero off-diagonal FLOPs are free MXU slack.
    """
    eye = jnp.eye(pack, dtype=jnp.float32)
    packed = {}
    for n in ("1", "2", "3"):
        packed[f"w{n}"] = jnp.kron(eye, params[f"w{n}"]).astype(jnp.bfloat16)
        packed[f"b{n}"] = jnp.tile(params[f"b{n}"], (1, pack))          # f32
    return packed


def deterministic_policy_forward(obs, packed_params, action_limit, *, pack,
                                 block_batch=8192, out_dtype=jnp.bfloat16):
    """Lane-packed, batch-tiled fused Pallas forward.

    obs: (B, obs_dim) float32 (streamed as f32; cast to bf16 inside the kernel).
    packed_params: output of prepare_packed_params(params, pack).
    Returns (B, action_dim) in out_dtype (bf16 by default for half writeback bytes).
    """
    B, obs_dim = obs.shape
    out_w = packed_params["w3"].shape[1]          # pack * action_dim (lane-dense: 128)
    in_w = pack * obs_dim
    action_dim = out_w // pack

    # Pad only to the packing factor (<=pack-1 rows) so real/pad rows never share a
    # packed lane-row; ragged tiles (not a multiple of TB) are handled by the grid.
    pad = (-B) % pack
    if pad:
        obs = jnp.pad(obs, ((0, pad), (0, 0)))
    B_pack = B + pad
    rows = B_pack // pack
    obs_packed = obs.reshape(rows, in_w)          # zero-copy row-major reshape

    # Packed-row tile: big (amortize ~0.35us/step), multiple of 8 sublanes, ragged OK.
    if rows < 8:
        TB = rows                                 # full-extent block (tiny batches)
    else:
        TB = min(_round_up(max(block_batch // pack, 8), 8), _round_up(rows, 8))
    grid = (pl.cdiv(rows, TB),)

    # Weights/biases: full-array blocks with constant index_maps -> fetched once,
    # VMEM-resident across every batch step.
    resident = lambda shape: pl.BlockSpec(shape, lambda b: (0, 0))

    kernel = functools.partial(_policy_kernel, action_limit=float(action_limit))

    out_packed = pl.pallas_call(
        kernel,
        out_shape=jax.ShapeDtypeStruct((rows, out_w), out_dtype),
        grid=grid,
        in_specs=[
            pl.BlockSpec((TB, in_w), lambda b: (b, 0)),   # streamed packed batch tile
            resident(packed_params["w1"].shape), resident(packed_params["b1"].shape),
            resident(packed_params["w2"].shape), resident(packed_params["b2"].shape),
            resident(packed_params["w3"].shape), resident(packed_params["b3"].shape),
        ],
        out_specs=pl.BlockSpec((TB, out_w), lambda b: (b, 0)),
        compiler_params=pltpu.CompilerParams(
            dimension_semantics=("parallel",),
            vmem_limit_bytes=32 * 1024 * 1024),
    )(obs_packed,
      packed_params["w1"], packed_params["b1"],
      packed_params["w2"], packed_params["b2"],
      packed_params["w3"], packed_params["b3"])

    out = out_packed.reshape(B_pack, action_dim)  # zero-copy un-pack
    return out[:B]


def init_params(key, obs_dim, hidden_sizes, action_dim):
    """Deterministic synthetic init (roughly matches nn.Linear's uniform fan-in init)."""
    sizes = [obs_dim, *hidden_sizes, action_dim]
    names = ["1", "2", "3"]
    assert len(sizes) - 1 == len(names)
    params = {}
    for n, (d_in, d_out) in zip(names, zip(sizes[:-1], sizes[1:])):
        key, kw, kb = jax.random.split(key, 3)
        bound = 1.0 / jnp.sqrt(d_in)
        params[f"w{n}"] = jax.random.uniform(
            kw, (d_in, d_out), jnp.float32, minval=-bound, maxval=bound)
        params[f"b{n}"] = jax.random.uniform(
            kb, (1, d_out), jnp.float32, minval=-bound, maxval=bound)
    return params


def reference_forward_f32(obs, params, action_limit):
    """Plain-JAX f32 reference (mirrors the PyTorch module semantics)."""
    h = jnp.maximum(obs @ params["w1"] + params["b1"], 0.0)
    h = jnp.maximum(h @ params["w2"] + params["b2"], 0.0)
    o = jnp.tanh(h @ params["w3"] + params["b3"])
    return action_limit * o


def reference_forward_bf16(obs, params, action_limit):
    """Plain-JAX reference with the same bf16-operand / f32-accumulate recipe."""
    x = obs.astype(jnp.bfloat16)
    w1 = params["w1"].astype(jnp.bfloat16)
    w2 = params["w2"].astype(jnp.bfloat16)
    w3 = params["w3"].astype(jnp.bfloat16)
    h = jnp.dot(x, w1, preferred_element_type=jnp.float32) + params["b1"]
    h = jnp.maximum(h, 0.0)
    h = jnp.dot(h.astype(jnp.bfloat16), w2,
                preferred_element_type=jnp.float32) + params["b2"]
    h = jnp.maximum(h, 0.0)
    o = jnp.dot(h.astype(jnp.bfloat16), w3,
                preferred_element_type=jnp.float32) + params["b3"]
    return action_limit * jnp.tanh(o)


if __name__ == "__main__":
    key = jax.random.PRNGKey(0)

    # DeterministicPolicy(obs_dim=16, action_dim=8, hidden_sizes=[32, 32],
    #                     activation=nn.ReLU, output_activation=nn.Tanh,
    #                     action_limit=2.0)
    batch = 8
    obs_dim = 16
    hidden_sizes = [32, 32]
    action_dim = 8
    action_limit = 2.0

    # Packing factor: enough rows per lane-row to make the output lane-dense (128).
    pack = 128 // math.gcd(action_dim, 128)        # = 16

    key, k_obs, k_params = jax.random.split(key, 3)
    obs = jax.random.normal(k_obs, (batch, obs_dim), jnp.float32)
    params = init_params(k_params, obs_dim, hidden_sizes, action_dim)
    packed_params = prepare_packed_params(params, pack)   # built once, off hot path

    # --- small-batch check (single packed row, single grid step) ---
    out = deterministic_policy_forward(obs, packed_params, action_limit, pack=pack)
    out = jax.block_until_ready(out)
    assert out.shape == (batch, action_dim)

    out_f32 = out.astype(jnp.float32)
    ref_bf = reference_forward_bf16(obs, params, action_limit)
    ref_f32 = reference_forward_f32(obs, params, action_limit)
    # bf16 output adds ~0.4% rel. error on top of the bf16-matmul recipe.
    assert jnp.allclose(out_f32, ref_bf, atol=1.5e-2, rtol=1.5e-2), "mismatch vs bf16 reference"
    assert jnp.allclose(out_f32, ref_f32, atol=4e-2, rtol=4e-2), "mismatch vs f32 reference"

    # --- multi-step grid + ragged last tile + pack-padding check ---
    key, k_obs2 = jax.random.split(key)
    batch2 = 300   # pads to 304 raw rows -> 19 packed rows; TB=8 -> grid=(3,), ragged tail
    obs2 = jax.random.normal(k_obs2, (batch2, obs_dim), jnp.float32)
    out2 = deterministic_policy_forward(obs2, packed_params, action_limit,
                                        pack=pack, block_batch=128)
    out2 = jax.block_until_ready(out2)
    assert out2.shape == (batch2, action_dim)
    ref2 = reference_forward_bf16(obs2, params, action_limit)
    assert jnp.allclose(out2.astype(jnp.float32), ref2, atol=1.5e-2, rtol=1.5e-2), \
        "mismatch on tiled/ragged batch"

    print("KERNEL_OK")
</pallas_src>

<mosaic_0001>
module attributes {stable_mosaic.version = 11 : i64} {
  func.func @_policy_kernel(%arg0: i32, %arg1: memref<1x256xf32, #tpu.memory_space<vmem>>, %arg2: memref<256x512xbf16, #tpu.memory_space<vmem>>, %arg3: memref<1x512xf32, #tpu.memory_space<vmem>>, %arg4: memref<512x512xbf16, #tpu.memory_space<vmem>>, %arg5: memref<1x512xf32, #tpu.memory_space<vmem>>, %arg6: memref<512x128xbf16, #tpu.memory_space<vmem>>, %arg7: memref<1x128xf32, #tpu.memory_space<vmem>>, %arg8: memref<1x128xbf16, #tpu.memory_space<vmem>>) attributes {dimension_semantics = [#tpu.dimension_semantics<parallel>], iteration_bounds = array<i64: 1>, scalar_prefetch = 0 : i64, scratch_operands = 0 : i64, tpu.core_type = #tpu.core_type<tc>, window_params = [{transform_indices = @transform_0, window_bounds = array<i64: 1, 256>}, {pipeline_mode = #tpu.pipeline_mode<synchronous>, transform_indices = @transform_1, window_bounds = array<i64: 256, 512>}, {pipeline_mode = #tpu.pipeline_mode<synchronous>, transform_indices = @transform_2, window_bounds = array<i64: 1, 512>}, {pipeline_mode = #tpu.pipeline_mode<synchronous>, transform_indices = @transform_3, window_bounds = array<i64: 512, 512>}, {pipeline_mode = #tpu.pipeline_mode<synchronous>, transform_indices = @transform_4, window_bounds = array<i64: 1, 512>}, {pipeline_mode = #tpu.pipeline_mode<synchronous>, transform_indices = @transform_5, window_bounds = array<i64: 512, 128>}, {pipeline_mode = #tpu.pipeline_mode<synchronous>, transform_indices = @transform_6, window_bounds = array<i64: 1, 128>}, {transform_indices = @transform_7, window_bounds = array<i64: 1, 128>}]} {
    %c0 = arith.constant 0 : index
    %c0_0 = arith.constant 0 : index
    %0 = vector.load %arg1[%c0, %c0_0] : memref<1x256xf32, #tpu.memory_space<vmem>>, vector<1x256xf32>
    %1 = arith.truncf %0 : vector<1x256xf32> to vector<1x256xbf16>
    %c0_1 = arith.constant 0 : index
    %c0_2 = arith.constant 0 : index
    %2 = vector.load %arg2[%c0_1, %c0_2] : memref<256x512xbf16, #tpu.memory_space<vmem>>, vector<256x512xbf16>
    %cst = arith.constant dense<0.000000e+00> : vector<1x512xf32>
    %3 = tpu.matmul %1, %2, %cst {dimension_numbers = #tpu.dot_dimension_numbers<[1], [0], [0], [1], [0, 0, 1, 1], [], []>} : vector<1x256xbf16>, vector<256x512xbf16>, vector<1x512xf32> -> vector<1x512xf32>
    %c0_3 = arith.constant 0 : index
    %c0_4 = arith.constant 0 : index
    %4 = vector.load %arg3[%c0_3, %c0_4] : memref<1x512xf32, #tpu.memory_space<vmem>>, vector<1x512xf32>
    %5 = arith.addf %3, %4 : vector<1x512xf32>
    %cst_5 = arith.constant 0.000000e+00 : f32
    %6 = vector.broadcast %cst_5 : f32 to vector<1x512xf32>
    %7 = arith.maximumf %5, %6 : vector<1x512xf32>
    %8 = arith.truncf %7 : vector<1x512xf32> to vector<1x512xbf16>
    %c0_6 = arith.constant 0 : index
    %c0_7 = arith.constant 0 : index
    %9 = vector.load %arg4[%c0_6, %c0_7] : memref<512x512xbf16, #tpu.memory_space<vmem>>, vector<512x512xbf16>
    %cst_8 = arith.constant dense<0.000000e+00> : vector<1x512xf32>
    %10 = tpu.matmul %8, %9, %cst_8 {dimension_numbers = #tpu.dot_dimension_numbers<[1], [0], [0], [1], [0, 0, 1, 1], [], []>} : vector<1x512xbf16>, vector<512x512xbf16>, vector<1x512xf32> -> vector<1x512xf32>
    %c0_9 = arith.constant 0 : index
    %c0_10 = arith.constant 0 : index
    %11 = vector.load %arg5[%c0_9, %c0_10] : memref<1x512xf32, #tpu.memory_space<vmem>>, vector<1x512xf32>
    %12 = arith.addf %10, %11 : vector<1x512xf32>
    %cst_11 = arith.constant 0.000000e+00 : f32
    %13 = vector.broadcast %cst_11 : f32 to vector<1x512xf32>
    %14 = arith.maximumf %12, %13 : vector<1x512xf32>
    %15 = arith.truncf %14 : vector<1x512xf32> to vector<1x512xbf16>
    %c0_12 = arith.constant 0 : index
    %c0_13 = arith.constant 0 : index
    %16 = vector.load %arg6[%c0_12, %c0_13] : memref<512x128xbf16, #tpu.memory_space<vmem>>, vector<512x128xbf16>
    %cst_14 = arith.constant dense<0.000000e+00> : vector<1x128xf32>
    %17 = tpu.matmul %15, %16, %cst_14 {dimension_numbers = #tpu.dot_dimension_numbers<[1], [0], [0], [1], [0, 0, 1, 1], [], []>} : vector<1x512xbf16>, vector<512x128xbf16>, vector<1x128xf32> -> vector<1x128xf32>
    %c0_15 = arith.constant 0 : index
    %c0_16 = arith.constant 0 : index
    %18 = vector.load %arg7[%c0_15, %c0_16] : memref<1x128xf32, #tpu.memory_space<vmem>>, vector<1x128xf32>
    %19 = arith.addf %17, %18 : vector<1x128xf32>
    %20 = math.tanh %19 : vector<1x128xf32>
    %cst_17 = arith.constant 2.000000e+00 : f32
    %21 = vector.broadcast %cst_17 : f32 to vector<1x128xf32>
    %22 = arith.mulf %21, %20 : vector<1x128xf32>
    %23 = arith.truncf %22 : vector<1x128xf32> to vector<1x128xbf16>
    %c0_18 = arith.constant 0 : index
    %c0_19 = arith.constant 0 : index
    %24 = vector.load %arg8[%c0_18, %c0_19] : memref<1x128xbf16, #tpu.memory_space<vmem>>, vector<1x128xbf16>
    tpu.vector_store %arg8[%c0_18, %c0_19], %23 {strides = array<i32>} : memref<1x128xbf16, #tpu.memory_space<vmem>>, vector<1x128xbf16>,
    return
  }
  func.func @transform_0(%arg0: i32) -> (i32, i32) {
    %c0_i32 = arith.constant 0 : i32
    %c0_i32_0 = arith.constant 0 : i32
    return %arg0, %c0_i32 : i32, i32
  }
  func.func @transform_1(%arg0: i32) -> (i32, i32) {
    %c0_i32 = arith.constant 0 : i32
    %c0_i32_0 = arith.constant 0 : i32
    %c0_i32_1 = arith.constant 0 : i32
    return %c0_i32, %c0_i32_0 : i32, i32
  }
  func.func @transform_2(%arg0: i32) -> (i32, i32) {
    %c0_i32 = arith.constant 0 : i32
    %c0_i32_0 = arith.constant 0 : i32
    %c0_i32_1 = arith.constant 0 : i32
    return %c0_i32, %c0_i32_0 : i32, i32
  }
  func.func @transform_3(%arg0: i32) -> (i32, i32) {
    %c0_i32 = arith.constant 0 : i32
    %c0_i32_0 = arith.constant 0 : i32
    %c0_i32_1 = arith.constant 0 : i32
    return %c0_i32, %c0_i32_0 : i32, i32
  }
  func.func @transform_4(%arg0: i32) -> (i32, i32) {
    %c0_i32 = arith.constant 0 : i32
    %c0_i32_0 = arith.constant 0 : i32
    %c0_i32_1 = arith.constant 0 : i32
    return %c0_i32, %c0_i32_0 : i32, i32
  }
  func.func @transform_5(%arg0: i32) -> (i32, i32) {
    %c0_i32 = arith.constant 0 : i32
    %c0_i32_0 = arith.constant 0 : i32
    %c0_i32_1 = arith.constant 0 : i32
    return %c0_i32, %c0_i32_0 : i32, i32
  }
  func.func @transform_6(%arg0: i32) -> (i32, i32) {
    %c0_i32 = arith.constant 0 : i32
    %c0_i32_0 = arith.constant 0 : i32
    %c0_i32_1 = arith.constant 0 : i32
    return %c0_i32, %c0_i32_0 : i32, i32
  }
  func.func @transform_7(%arg0: i32) -> (i32, i32) {
    %c0_i32 = arith.constant 0 : i32
    %c0_i32_0 = arith.constant 0 : i32
    return %arg0, %c0_i32 : i32, i32
  }
}

</mosaic_0001>

<llo_original>
// kernel: tpu_custom_call.1
$region0: #{tpu_custom_call.1}
  #allocation0 [shape = 'u32[]', space=smem, size = 0x4, offset = 0x4, fixed_abs, tag = 'smem constant byte address 0x4 - core index']
  #allocation1 [shape = 'u32[144,128]{1,0:T(1,128)}', space=vmem, size = 0x12000, scoped, tag = 'internal scratch']
  %s0 = inlined_call_operand.hbm [shape: f32[1,256], index: 0, kind: input, shape index: {}]
  %s1 = inlined_call_operand.hbm [shape: bf16[256,512], index: 1, kind: input, shape index: {}]
  %s2 = inlined_call_operand.hbm [shape: f32[1,512], index: 2, kind: input, shape index: {}]
  %s3 = inlined_call_operand.hbm [shape: bf16[512,512], index: 3, kind: input, shape index: {}]
  %s4 = inlined_call_operand.vmem [shape: f32[1,512], index: 4, kind: input, shape index: {}]
  %s5 = inlined_call_operand.hbm [shape: bf16[512,128], index: 5, kind: input, shape index: {}]
  %s6 = inlined_call_operand.vmem [shape: f32[1,128], index: 6, kind: input, shape index: {}]
  %s7 = inlined_call_operand.hbm [shape: bf16[1,128], index: 7, kind: output, shape index: {}]
  %s8 = sld [smem:[#allocation0]]
  $region58: #{tpu_custom_call.1} parent=0
    _
  %s10 = ssub.s32 1, %s8
  %s11 = scalar_select 0, %s10, %s8
  $region1: #{tpu_custom_call.1} parent=0
    #allocation2 [shape = 'u8[1024]{0}', space=vmem, size = 0x400, scoped, tag = 'input window, operand 0, single buffered']
    #allocation3 [shape = 's32[1]{0}', space=sflag, size = 0x4, scoped, tag = 'scoped memory for tpu_custom_call.1']
    #allocation4 [shape = 's32[1]{0}', space=sflag, size = 0x4, scoped, tag = 'scoped memory for tpu_custom_call.1']
    #allocation5 [shape = 'u8[262144]{0}', space=vmem, size = 0x40000, scoped, tag = 'input window, operand 1, single buffered']
    #allocation6 [shape = 's32[1]{0}', space=sflag, size = 0x4, scoped, tag = 'scoped memory for tpu_custom_call.1']
    #allocation7 [shape = 'u8[2048]{0}', space=vmem, size = 0x800, scoped, tag = 'input window, operand 2, single buffered']
    #allocation8 [shape = 'u8[524288]{0}', space=vmem, size = 0x80000, scoped, tag = 'input window, operand 3, single buffered']
    #allocation9 [shape = 's32[1]{0}', space=sflag, size = 0x4, scoped, tag = 'scoped memory for tpu_custom_call.1']
    #allocation10 [shape = 'u8[131072]{0}', space=vmem, size = 0x20000, scoped, tag = 'input window, operand 5, single buffered']
    #allocation11 [shape = 'u8[512]{0}', space=vmem, size = 0x400, scoped, tag = 'output window, operand 0, single buffered']
    %12 = vsyncpa [#allocation3], 0
    %13 = vsyncpa [#allocation6], 0
    %14 = vsyncpa [#allocation9], 0
    %15 = vsyncpa [#allocation4], 0
    // Predicated region
    $region2: #{tpu_custom_call.1} parent=1 // pred_check
      _
    $region3: #{tpu_custom_call.1} parent=1 // pred_check_branch
      %17 = sbr.rel (0) target = $region5
    $region4: #{tpu_custom_call.1} parent=1 // pred_region
      %s19 = ssub.s32 32, 32
      %20 = vsyncadd [#allocation3], %s19
      %s22 = sshll.u32 [#allocation2], 4
      %s23 = int_to_ptr.vmem [resolvable:$true] %s22
      %25 = dma.hbm_to_vmem [thread:$0]  %s0, 32, %s23, [#allocation3]
    $region5: #{tpu_custom_call.1} parent=1 // pred_fallthru
      _
    // Predicated region
    $region6: #{tpu_custom_call.1} parent=1 // pred_check
      _
    $region7: #{tpu_custom_call.1} parent=1 // pred_check_branch
      %27 = sbr.rel (0) target = $region9
    $region8: #{tpu_custom_call.1} parent=1 // pred_region
      %s29 = ssub.s32 8192, 8192
      %30 = vsyncadd [#allocation6], %s29
      %s31 = sshll.u32 [#allocation5], 4
      %s32 = int_to_ptr.vmem [resolvable:$true] %s31
      %37 = dma.hbm_to_vmem [thread:$0]  %s1, 8192, %s32, [#allocation6], 256, 256, 16
    $region9: #{tpu_custom_call.1} parent=1 // pred_fallthru
      _
    // Predicated region
    $region10: #{tpu_custom_call.1} parent=1 // pred_check
      _
    $region11: #{tpu_custom_call.1} parent=1 // pred_check_branch
      %39 = sbr.rel (0) target = $region13
    $region12: #{tpu_custom_call.1} parent=1 // pred_region
      %s41 = ssub.s32 64, 64
      %42 = vsyncadd [#allocation6], %s41
      %s44 = sshll.u32 [#allocation7], 4
      %s45 = int_to_ptr.vmem [resolvable:$true] %s44
      %47 = dma.hbm_to_vmem [thread:$0]  %s2, 64, %s45, [#allocation6]
    $region13: #{tpu_custom_call.1} parent=1 // pred_fallthru
      _
    // Predicated region
    $region14: #{tpu_custom_call.1} parent=1 // pred_check
      _
    $region15: #{tpu_custom_call.1} parent=1 // pred_check_branch
      %49 = sbr.rel (0) target = $region17
    $region16: #{tpu_custom_call.1} parent=1 // pred_region
      %s51 = ssub.s32 16384, 16384
      %52 = vsyncadd [#allocation9], %s51
      %s53 = sshll.u32 [#allocation8], 4
      %s54 = int_to_ptr.vmem [resolvable:$true] %s53
      %59 = dma.hbm_to_vmem [thread:$0]  %s3, 16384, %s54, [#allocation9], 256, 256, 16
    $region17: #{tpu_custom_call.1} parent=1 // pred_fallthru
      _
    // Predicated region
    $region18: #{tpu_custom_call.1} parent=1 // pred_check
      _
    $region19: #{tpu_custom_call.1} parent=1 // pred_check_branch
      %61 = sbr.rel (0) target = $region21
    $region20: #{tpu_custom_call.1} parent=1 // pred_region
      _
    $region21: #{tpu_custom_call.1} parent=1 // pred_fallthru
      _
    // Predicated region
    $region22: #{tpu_custom_call.1} parent=1 // pred_check
      _
    $region23: #{tpu_custom_call.1} parent=1 // pred_check_branch
      %63 = sbr.rel (0) target = $region25
    $region24: #{tpu_custom_call.1} parent=1 // pred_region
      %s65 = ssub.s32 4096, 4096
      %66 = vsyncadd [#allocation9], %s65
      %s67 = sshll.u32 [#allocation10], 4
      %s68 = int_to_ptr.vmem [resolvable:$true] %s67
      %73 = dma.hbm_to_vmem [thread:$0]  %s5, 4096, %s68, [#allocation9], 64, 64, 4
    $region25: #{tpu_custom_call.1} parent=1 // pred_fallthru
      _
    // Predicated region
    $region26: #{tpu_custom_call.1} parent=1 // pred_check
      _
    $region27: #{tpu_custom_call.1} parent=1 // pred_check_branch
      %75 = sbr.rel (0) target = $region29
    $region28: #{tpu_custom_call.1} parent=1 // pred_region
      _
    $region29: #{tpu_custom_call.1} parent=1 // pred_fallthru
      _
    // Predicated region
    $region30: #{tpu_custom_call.1} parent=1 // pred_check
      _
    $region31: #{tpu_custom_call.1} parent=1 // pred_check_branch
      %77 = sbr.rel (0) target = $region33
    $region32: #{tpu_custom_call.1} parent=1 // pred_region
      %78 = dma.done [#allocation3], 32
    $region33: #{tpu_custom_call.1} parent=1 // pred_fallthru
      _
    // Predicated region
    $region34: #{tpu_custom_call.1} parent=1 // pred_check
      _
    $region35: #{tpu_custom_call.1} parent=1 // pred_check_branch
      %80 = sbr.rel (0) target = $region37
    $region36: #{tpu_custom_call.1} parent=1 // pred_region
      %81 = dma.done [#allocation6], 8192
    $region37: #{tpu_custom_call.1} parent=1 // pred_fallthru
      _
    // Predicated region
    $region38: #{tpu_custom_call.1} parent=1 // pred_check
      _
    $region39: #{tpu_custom_call.1} parent=1 // pred_check_branch
      %83 = sbr.rel (0) target = $region41
    $region40: #{tpu_custom_call.1} parent=1 // pred_region
      %84 = dma.done [#allocation6], 64
    $region41: #{tpu_custom_call.1} parent=1 // pred_fallthru
      _
    // Predicated region
    $region42: #{tpu_custom_call.1} parent=1 // pred_check
      _
    $region43: #{tpu_custom_call.1} parent=1 // pred_check_branch
      %86 = sbr.rel (0) target = $region45
    $region44: #{tpu_custom_call.1} parent=1 // pred_region
      %87 = dma.done [#allocation9], 16384
    $region45: #{tpu_custom_call.1} parent=1 // pred_fallthru
      _
    // Predicated region
    $region46: #{tpu_custom_call.1} parent=1 // pred_check
      _
    $region47: #{tpu_custom_call.1} parent=1 // pred_check_branch
      %89 = sbr.rel (0) target = $region49
    $region48: #{tpu_custom_call.1} parent=1 // pred_region
      %90 = dma.done [#allocation9], 4096
    $region49: #{tpu_custom_call.1} parent=1 // pred_fallthru
      _
    %v92 = vld [vmem:[#allocation2] sm:$0x3]
    %v94 = vlaneseq
    %v95 = vshrl.u32 %v94, 7
    %v96 = vsub.s32 0, %v95
    %v97 = vrot.slane %v92, %v96
    %v98 = vlaneseq
    %v99 = vshrl.u32 %v98, 7
    %v100 = vsub.s32 1, %v99
    %v101 = vrot.slane %v92, %v100
    %v104 = vpack.c.bf16 %v97, %v97
    %v105 = vpack.c.bf16 %v101, %v101
    %v106 = vld [vmem:[#allocation5] sm:$0xff]
    %v107 = vld [vmem:[#allocation5 + $0x8] sm:$0xff]
    %v108 = vld [vmem:[#allocation5 + $0x10] sm:$0xff]
    %v109 = vld [vmem:[#allocation5 + $0x18] sm:$0xff]
    %v110 = vld [vmem:[#allocation5 + $0x20] sm:$0xff]
    %v111 = vld [vmem:[#allocation5 + $0x28] sm:$0xff]
    %v112 = vld [vmem:[#allocation5 + $0x30] sm:$0xff]
    %v113 = vld [vmem:[#allocation5 + $0x38] sm:$0xff]
    %v114 = vld [vmem:[#allocation5 + $0x40] sm:$0xff]
    %v115 = vld [vmem:[#allocation5 + $0x48] sm:$0xff]
    %v116 = vld [vmem:[#allocation5 + $0x50] sm:$0xff]
    %v117 = vld [vmem:[#allocation5 + $0x58] sm:$0xff]
    %v118 = vld [vmem:[#allocation5 + $0x60] sm:$0xff]
    %v119 = vld [vmem:[#allocation5 + $0x68] sm:$0xff]
    %v120 = vld [vmem:[#allocation5 + $0x70] sm:$0xff]
    %v121 = vld [vmem:[#allocation5 + $0x78] sm:$0xff]
    %v122 = vld [vmem:[#allocation5 + $0x80] sm:$0xff]
    %v123 = vld [vmem:[#allocation5 + $0x88] sm:$0xff]
    %v124 = vld [vmem:[#allocation5 + $0x90] sm:$0xff]
    %v125 = vld [vmem:[#allocation5 + $0x98] sm:$0xff]
    %v126 = vld [vmem:[#allocation5 + $0xa0] sm:$0xff]
    %v127 = vld [vmem:[#allocation5 + $0xa8] sm:$0xff]
    %v128 = vld [vmem:[#allocation5 + $0xb0] sm:$0xff]
    %v129 = vld [vmem:[#allocation5 + $0xb8] sm:$0xff]
    %v130 = vld [vmem:[#allocation5 + $0xc0] sm:$0xff]
    %v131 = vld [vmem:[#allocation5 + $0xc8] sm:$0xff]
    %v132 = vld [vmem:[#allocation5 + $0xd0] sm:$0xff]
    %v133 = vld [vmem:[#allocation5 + $0xd8] sm:$0xff]
    %v134 = vld [vmem:[#allocation5 + $0xe0] sm:$0xff]
    %v135 = vld [vmem:[#allocation5 + $0xe8] sm:$0xff]
    %v136 = vld [vmem:[#allocation5 + $0xf0] sm:$0xff]
    %v137 = vld [vmem:[#allocation5 + $0xf8] sm:$0xff]
    %v138 = vld [vmem:[#allocation5 + $0x100] sm:$0xff]
    %v139 = vld [vmem:[#allocation5 + $0x108] sm:$0xff]
    %v140 = vld [vmem:[#allocation5 + $0x110] sm:$0xff]
    %v141 = vld [vmem:[#allocation5 + $0x118] sm:$0xff]
    %v142 = vld [vmem:[#allocation5 + $0x120] sm:$0xff]
    %v143 = vld [vmem:[#allocation5 + $0x128] sm:$0xff]
    %v144 = vld [vmem:[#allocation5 + $0x130] sm:$0xff]
    %v145 = vld [vmem:[#allocation5 + $0x138] sm:$0xff]
    %v146 = vld [vmem:[#allocation5 + $0x140] sm:$0xff]
    %v147 = vld [vmem:[#allocation5 + $0x148] sm:$0xff]
    %v148 = vld [vmem:[#allocation5 + $0x150] sm:$0xff]
    %v149 = vld [vmem:[#allocation5 + $0x158] sm:$0xff]
    %v150 = vld [vmem:[#allocation5 + $0x160] sm:$0xff]
    %v151 = vld [vmem:[#allocation5 + $0x168] sm:$0xff]
    %v152 = vld [vmem:[#allocation5 + $0x170] sm:$0xff]
    %v153 = vld [vmem:[#allocation5 + $0x178] sm:$0xff]
    %v154 = vld [vmem:[#allocation5 + $0x180] sm:$0xff]
    %v155 = vld [vmem:[#allocation5 + $0x188] sm:$0xff]
    %v156 = vld [vmem:[#allocation5 + $0x190] sm:$0xff]
    %v157 = vld [vmem:[#allocation5 + $0x198] sm:$0xff]
    %v158 = vld [vmem:[#allocation5 + $0x1a0] sm:$0xff]
    %v159 = vld [vmem:[#allocation5 + $0x1a8] sm:$0xff]
    %v160 = vld [vmem:[#allocation5 + $0x1b0] sm:$0xff]
    %v161 = vld [vmem:[#allocation5 + $0x1b8] sm:$0xff]
    %v162 = vld [vmem:[#allocation5 + $0x1c0] sm:$0xff]
    %v163 = vld [vmem:[#allocation5 + $0x1c8] sm:$0xff]
    %v164 = vld [vmem:[#allocation5 + $0x1d0] sm:$0xff]
    %v165 = vld [vmem:[#allocation5 + $0x1d8] sm:$0xff]
    %v166 = vld [vmem:[#allocation5 + $0x1e0] sm:$0xff]
    %v167 = vld [vmem:[#allocation5 + $0x1e8] sm:$0xff]
    %v168 = vld [vmem:[#allocation5 + $0x1f0] sm:$0xff]
    %v169 = vld [vmem:[#allocation5 + $0x1f8] sm:$0xff]
    %v170 = vld [vmem:[#allocation7] sm:$0xf]
    %v235 = vunpack.c.l.b16 %v106
    %v236 = vunpack.c.h.b16 %v106
    %v237 = vunpack.c.l.b16 %v107
    %v238 = vunpack.c.h.b16 %v107
    %v239 = vunpack.c.l.b16 %v108
    %v240 = vunpack.c.h.b16 %v108
    %v241 = vunpack.c.l.b16 %v109
    %v242 = vunpack.c.h.b16 %v109
    %v243 = vunpack.c.l.b16 %v110
    %v244 = vunpack.c.h.b16 %v110
    %v245 = vunpack.c.l.b16 %v111
    %v246 = vunpack.c.h.b16 %v111
    %v247 = vunpack.c.l.b16 %v112
    %v248 = vunpack.c.h.b16 %v112
    %v249 = vunpack.c.l.b16 %v113
    %v250 = vunpack.c.h.b16 %v113
    %v251 = vunpack.c.l.b16 %v114
    %v252 = vunpack.c.h.b16 %v114
    %v253 = vunpack.c.l.b16 %v115
    %v254 = vunpack.c.h.b16 %v115
    %v255 = vunpack.c.l.b16 %v116
    %v256 = vunpack.c.h.b16 %v116
    %v257 = vunpack.c.l.b16 %v117
    %v258 = vunpack.c.h.b16 %v117
    %v259 = vunpack.c.l.b16 %v118
    %v260 = vunpack.c.h.b16 %v118
    %v261 = vunpack.c.l.b16 %v119
    %v262 = vunpack.c.h.b16 %v119
    %v263 = vunpack.c.l.b16 %v120
    %v264 = vunpack.c.h.b16 %v120
    %v265 = vunpack.c.l.b16 %v121
    %v266 = vunpack.c.h.b16 %v121
    %v267 = vunpack.c.l.b16 %v122
    %v268 = vunpack.c.h.b16 %v122
    %v269 = vunpack.c.l.b16 %v123
    %v270 = vunpack.c.h.b16 %v123
    %v271 = vunpack.c.l.b16 %v124
    %v272 = vunpack.c.h.b16 %v124
    %v273 = vunpack.c.l.b16 %v125
    %v274 = vunpack.c.h.b16 %v125
    %v275 = vunpack.c.l.b16 %v126
    %v276 = vunpack.c.h.b16 %v126
    %v277 = vunpack.c.l.b16 %v127
    %v278 = vunpack.c.h.b16 %v127
    %v279 = vunpack.c.l.b16 %v128
    %v280 = vunpack.c.h.b16 %v128
    %v281 = vunpack.c.l.b16 %v129
    %v282 = vunpack.c.h.b16 %v129
    %v283 = vunpack.c.l.b16 %v130
    %v284 = vunpack.c.h.b16 %v130
    %v285 = vunpack.c.l.b16 %v131
    %v286 = vunpack.c.h.b16 %v131
    %v287 = vunpack.c.l.b16 %v132
    %v288 = vunpack.c.h.b16 %v132
    %v289 = vunpack.c.l.b16 %v133
    %v290 = vunpack.c.h.b16 %v133
    %v291 = vunpack.c.l.b16 %v134
    %v292 = vunpack.c.h.b16 %v134
    %v293 = vunpack.c.l.b16 %v135
    %v294 = vunpack.c.h.b16 %v135
    %v295 = vunpack.c.l.b16 %v136
    %v296 = vunpack.c.h.b16 %v136
    %v297 = vunpack.c.l.b16 %v137
    %v298 = vunpack.c.h.b16 %v137
    %v299 = vunpack.c.l.b16 %v138
    %v300 = vunpack.c.h.b16 %v138
    %v301 = vunpack.c.l.b16 %v139
    %v302 = vunpack.c.h.b16 %v139
    %v303 = vunpack.c.l.b16 %v140
    %v304 = vunpack.c.h.b16 %v140
    %v305 = vunpack.c.l.b16 %v141
    %v306 = vunpack.c.h.b16 %v141
    %v307 = vunpack.c.l.b16 %v142
    %v308 = vunpack.c.h.b16 %v142
    %v309 = vunpack.c.l.b16 %v143
    %v310 = vunpack.c.h.b16 %v143
    %v311 = vunpack.c.l.b16 %v144
    %v312 = vunpack.c.h.b16 %v144
    %v313 = vunpack.c.l.b16 %v145
    %v314 = vunpack.c.h.b16 %v145
    %v315 = vunpack.c.l.b16 %v146
    %v316 = vunpack.c.h.b16 %v146
    %v317 = vunpack.c.l.b16 %v147
    %v318 = vunpack.c.h.b16 %v147
    %v319 = vunpack.c.l.b16 %v148
    %v320 = vunpack.c.h.b16 %v148
    %v321 = vunpack.c.l.b16 %v149
    %v322 = vunpack.c.h.b16 %v149
    %v323 = vunpack.c.l.b16 %v150
    %v324 = vunpack.c.h.b16 %v150
    %v325 = vunpack.c.l.b16 %v151
    %v326 = vunpack.c.h.b16 %v151
    %v327 = vunpack.c.l.b16 %v152
    %v328 = vunpack.c.h.b16 %v152
    %v329 = vunpack.c.l.b16 %v153
    %v330 = vunpack.c.h.b16 %v153
    %v331 = vunpack.c.l.b16 %v154
    %v332 = vunpack.c.h.b16 %v154
    %v333 = vunpack.c.l.b16 %v155
    %v334 = vunpack.c.h.b16 %v155
    %v335 = vunpack.c.l.b16 %v156
    %v336 = vunpack.c.h.b16 %v156
    %v337 = vunpack.c.l.b16 %v157
    %v338 = vunpack.c.h.b16 %v157
    %v339 = vunpack.c.l.b16 %v158
    %v340 = vunpack.c.h.b16 %v158
    %v341 = vunpack.c.l.b16 %v159
    %v342 = vunpack.c.h.b16 %v159
    %v343 = vunpack.c.l.b16 %v160
    %v344 = vunpack.c.h.b16 %v160
    %v345 = vunpack.c.l.b16 %v161
    %v346 = vunpack.c.h.b16 %v161
    %v347 = vunpack.c.l.b16 %v162
    %v348 = vunpack.c.h.b16 %v162
    %v349 = vunpack.c.l.b16 %v163
    %v350 = vunpack.c.h.b16 %v163
    %v351 = vunpack.c.l.b16 %v164
    %v352 = vunpack.c.h.b16 %v164
    %v353 = vunpack.c.l.b16 %v165
    %v354 = vunpack.c.h.b16 %v165
    %v355 = vunpack.c.l.b16 %v166
    %v356 = vunpack.c.h.b16 %v166
    %v357 = vunpack.c.l.b16 %v167
    %v358 = vunpack.c.h.b16 %v167
    %v359 = vunpack.c.l.b16 %v168
    %v360 = vunpack.c.h.b16 %v168
    %v361 = vunpack.c.l.b16 %v169
    %v362 = vunpack.c.h.b16 %v169
    %v363 = vpack.c.b16 %v239, %v235
    %v364 = vpack.c.b16 %v240, %v236
    %v365 = vpack.c.b16 %v241, %v237
    %v366 = vpack.c.b16 %v242, %v238
    %v367 = vpack.c.b16 %v247, %v243
    %v368 = vpack.c.b16 %v248, %v244
    %v369 = vpack.c.b16 %v249, %v245
    %v370 = vpack.c.b16 %v250, %v246
    %v371 = vpack.c.b16 %v255, %v251
    %v372 = vpack.c.b16 %v256, %v252
    %v373 = vpack.c.b16 %v257, %v253
    %v374 = vpack.c.b16 %v258, %v254
    %v375 = vpack.c.b16 %v263, %v259
    %v376 = vpack.c.b16 %v264, %v260
    %v377 = vpack.c.b16 %v265, %v261
    %v378 = vpack.c.b16 %v266, %v262
    %v379 = vpack.c.b16 %v271, %v267
    %v380 = vpack.c.b16 %v272, %v268
    %v381 = vpack.c.b16 %v273, %v269
    %v382 = vpack.c.b16 %v274, %v270
    %v383 = vpack.c.b16 %v279, %v275
    %v384 = vpack.c.b16 %v280, %v276
    %v385 = vpack.c.b16 %v281, %v277
    %v386 = vpack.c.b16 %v282, %v278
    %v387 = vpack.c.b16 %v287, %v283
    %v388 = vpack.c.b16 %v288, %v284
    %v389 = vpack.c.b16 %v289, %v285
    %v390 = vpack.c.b16 %v290, %v286
    %v391 = vpack.c.b16 %v295, %v291
    %v392 = vpack.c.b16 %v296, %v292
    %v393 = vpack.c.b16 %v297, %v293
    %v394 = vpack.c.b16 %v298, %v294
    %v395 = vpack.c.b16 %v303, %v299
    %v396 = vpack.c.b16 %v304, %v300
    %v397 = vpack.c.b16 %v305, %v301
    %v398 = vpack.c.b16 %v306, %v302
    %v399 = vpack.c.b16 %v311, %v307
    %v400 = vpack.c.b16 %v312, %v308
    %v401 = vpack.c.b16 %v313, %v309
    %v402 = vpack.c.b16 %v314, %v310
    %v403 = vpack.c.b16 %v319, %v315
    %v404 = vpack.c.b16 %v320, %v316
    %v405 = vpack.c.b16 %v321, %v317
    %v406 = vpack.c.b16 %v322, %v318
    %v407 = vpack.c.b16 %v327, %v323
    %v408 = vpack.c.b16 %v328, %v324
    %v409 = vpack.c.b16 %v329, %v325
    %v410 = vpack.c.b16 %v330, %v326
    %v411 = vpack.c.b16 %v335, %v331
    %v412 = vpack.c.b16 %v336, %v332
    %v413 = vpack.c.b16 %v337, %v333
    %v414 = vpack.c.b16 %v338, %v334
    %v415 = vpack.c.b16 %v343, %v339
    %v416 = vpack.c.b16 %v344, %v340
    %v417 = vpack.c.b16 %v345, %v341
    %v418 = vpack.c.b16 %v346, %v342
    %v419 = vpack.c.b16 %v351, %v347
    %v420 = vpack.c.b16 %v352, %v348
    %v421 = vpack.c.b16 %v353, %v349
    %v422 = vpack.c.b16 %v354, %v350
    %v423 = vpack.c.b16 %v359, %v355
    %v424 = vpack.c.b16 %v360, %v356
    %v425 = vpack.c.b16 %v361, %v357
    %v426 = vpack.c.b16 %v362, %v358
    %v492 = vlaneseq
    %v493 = vshrl.u32 %v492, 7
    %v494 = vsub.s32 0, %v493
    %v495 = vrot.slane %v170, %v494
    %v496 = vlaneseq
    %v497 = vshrl.u32 %v496, 7
    %v498 = vsub.s32 1, %v497
    %v499 = vrot.slane %v170, %v498
    %v500 = vlaneseq
    %v501 = vshrl.u32 %v500, 7
    %v502 = vsub.s32 2, %v501
    %v503 = vrot.slane %v170, %v502
    %v504 = vlaneseq
    %v505 = vshrl.u32 %v504, 7
    %v506 = vsub.s32 3, %v505
    %v507 = vrot.slane %v170, %v506
    %512 = vmatprep.subr.bf16.mxu0 %v392
    %513 = vmatpush1.bf16.msra.mxu0 %v391
    %514 = vmatprep.subr.bf16.mxu0 %v388
    %515 = vmatpush1.bf16.msra.mxu0 %v387
    %516 = vmatprep.subr.bf16.mxu0 %v384
    %517 = vmatpush1.bf16.msra.mxu0 %v383
    %518 = vmatprep.subr.bf16.mxu0 %v380
    %519 = vmatpush1.bf16.msra.mxu0 %v379
    %520 = vmatprep.subr.bf16.mxu0 %v376
    %521 = vmatpush1.bf16.msra.mxu0 %v375
    %522 = vmatprep.subr.bf16.mxu0 %v372
    %523 = vmatpush1.bf16.msra.mxu0 %v371
    %524 = vmatprep.subr.bf16.mxu0 %v368
    %525 = vmatpush1.bf16.msra.mxu0 %v367
    %526 = vmatprep.subr.bf16.mxu0 %v364
    %527 = vmatpush1.bf16.msra.mxu0 %v363
    %528 = vmatprep.subr.bf16.mxu0 %v424
    %529 = vmatpush2.bf16.msra.mxu0 %v423
    %530 = vmatprep.subr.bf16.mxu0 %v420
    %531 = vmatpush2.bf16.msra.mxu0 %v419
    %532 = vmatprep.subr.bf16.mxu0 %v416
    %533 = vmatpush2.bf16.msra.mxu0 %v415
    %534 = vmatprep.subr.bf16.mxu0 %v412
    %535 = vmatpush2.bf16.msra.mxu0 %v411
    %536 = vmatprep.subr.bf16.mxu0 %v408
    %537 = vmatpush2.bf16.msra.mxu0 %v407
    %538 = vmatprep.subr.bf16.mxu0 %v404
    %539 = vmatpush2.bf16.msra.mxu0 %v403
    %540 = vmatprep.subr.bf16.mxu0 %v400
    %541 = vmatpush2.bf16.msra.mxu0 %v399
    %542 = vmatprep.subr.bf16.mxu0 %v396
    %543 = vmatpush2.bf16.msra.mxu0 %v395
    %544 = vmatprep.mubr.bf16.mxu0 %v105
    %545 = vmatmul.mubr.bf16.gmra.mxu0 %v104
    %v546 = vpop.f32.mrf.mxu0
    %v547 = vadd.f32 %v495, %v546
    %v548 = vpop.f32.mrf.mxu0
    %v549 = vadd.f32 %v499, %v548
    %v550 = vpop.f32.mrf.mxu0
    %v551 = vpop.f32.mrf.mxu0
    %552 = vdwg.mxu0
    %553 = vmatprep.subr.bf16.mxu0 %v394
    %554 = vmatpush1.bf16.msra.mxu0 %v393
    %555 = vmatprep.subr.bf16.mxu0 %v390
    %556 = vmatpush1.bf16.msra.mxu0 %v389
    %557 = vmatprep.subr.bf16.mxu0 %v386
    %558 = vmatpush1.bf16.msra.mxu0 %v385
    %559 = vmatprep.subr.bf16.mxu0 %v382
    %560 = vmatpush1.bf16.msra.mxu0 %v381
    %561 = vmatprep.subr.bf16.mxu0 %v378
    %562 = vmatpush1.bf16.msra.mxu0 %v377
    %563 = vmatprep.subr.bf16.mxu0 %v374
    %564 = vmatpush1.bf16.msra.mxu0 %v373
    %565 = vmatprep.subr.bf16.mxu0 %v370
    %566 = vmatpush1.bf16.msra.mxu0 %v369
    %567 = vmatprep.subr.bf16.mxu0 %v366
    %568 = vmatpush1.bf16.msra.mxu0 %v365
    %569 = vmatprep.subr.bf16.mxu0 %v426
    %570 = vmatpush2.bf16.msra.mxu0 %v425
    %571 = vmatprep.subr.bf16.mxu0 %v422
    %572 = vmatpush2.bf16.msra.mxu0 %v421
    %573 = vmatprep.subr.bf16.mxu0 %v418
    %574 = vmatpush2.bf16.msra.mxu0 %v417
    %575 = vmatprep.subr.bf16.mxu0 %v414
    %576 = vmatpush2.bf16.msra.mxu0 %v413
    %577 = vmatprep.subr.bf16.mxu0 %v410
    %578 = vmatpush2.bf16.msra.mxu0 %v409
    %579 = vmatprep.subr.bf16.mxu0 %v406
    %580 = vmatpush2.bf16.msra.mxu0 %v405
    %581 = vmatprep.subr.bf16.mxu0 %v402
    %582 = vmatpush2.bf16.msra.mxu0 %v401
    %583 = vmatprep.subr.bf16.mxu0 %v398
    %584 = vmatpush2.bf16.msra.mxu0 %v397
    %585 = vmatprep.mubr.bf16.mxu0 %v105
    %586 = vmatmul.mubr.bf16.gmra.mxu0 %v104
    %v587 = vpop.f32.mrf.mxu0
    %v588 = vadd.f32 %v503, %v587
    %v589 = vpop.f32.mrf.mxu0
    %v590 = vadd.f32 %v507, %v589
    %v591 = vpop.f32.mrf.mxu0
    %v592 = vpop.f32.mrf.mxu0
    %593 = vdwg.mxu0
    %v594 = vmax.f32 %v547, 0.0
    %v595 = vmax.f32 %v549, 0.0
    %v596 = vmax.f32 %v588, 0.0
    %v597 = vmax.f32 %v590, 0.0
    %v598 = vpack.c.bf16 %v594, %v594
    %v599 = vpack.c.bf16 %v595, %v595
    %v600 = vpack.c.bf16 %v596, %v596
    %v601 = vpack.c.bf16 %v597, %v597
    %v602 = vld [vmem:[#allocation8] sm:$0xff]
    %v603 = vld [vmem:[#allocation8 + $0x8] sm:$0xff]
    %v604 = vld [vmem:[#allocation8 + $0x10] sm:$0xff]
    %v605 = vld [vmem:[#allocation8 + $0x18] sm:$0xff]
    %v606 = vld [vmem:[#allocation8 + $0x20] sm:$0xff]
    %v607 = vld [vmem:[#allocation8 + $0x28] sm:$0xff]
    %v608 = vld [vmem:[#allocation8 + $0x30] sm:$0xff]
    %v609 = vld [vmem:[#allocation8 + $0x38] sm:$0xff]
    %v610 = vld [vmem:[#allocation8 + $0x40] sm:$0xff]
    %v611 = vld [vmem:[#allocation8 + $0x48] sm:$0xff]
    %v612 = vld [vmem:[#allocation8 + $0x50] sm:$0xff]
    %v613 = vld [vmem:[#allocation8 + $0x58] sm:$0xff]
    %v614 = vld [vmem:[#allocation8 + $0x60] sm:$0xff]
    %v615 = vld [vmem:[#allocation8 + $0x68] sm:$0xff]
    %v616 = vld [vmem:[#allocation8 + $0x70] sm:$0xff]
    %v617 = vld [vmem:[#allocation8 + $0x78] sm:$0xff]
    %v618 = vld [vmem:[#allocation8 + $0x80] sm:$0xff]
    %v619 = vld [vmem:[#allocation8 + $0x88] sm:$0xff]
    %v620 = vld [vmem:[#allocation8 + $0x90] sm:$0xff]
    %v621 = vld [vmem:[#allocation8 + $0x98] sm:$0xff]
    %v622 = vld [vmem:[#allocation8 + $0xa0] sm:$0xff]
    %v623 = vld [vmem:[#allocation8 + $0xa8] sm:$0xff]
    %v624 = vld [vmem:[#allocation8 + $0xb0] sm:$0xff]
    %v625 = vld [vmem:[#allocation8 + $0xb8] sm:$0xff]
    %v626 = vld [vmem:[#allocation8 + $0xc0] sm:$0xff]
    %v627 = vld [vmem:[#allocation8 + $0xc8] sm:$0xff]
    %v628 = vld [vmem:[#allocation8 + $0xd0] sm:$0xff]
    %v629 = vld [vmem:[#allocation8 + $0xd8] sm:$0xff]
    %v630 = vld [vmem:[#allocation8 + $0xe0] sm:$0xff]
    %v631 = vld [vmem:[#allocation8 + $0xe8] sm:$0xff]
    %v632 = vld [vmem:[#allocation8 + $0xf0] sm:$0xff]
    %v633 = vld [vmem:[#allocation8 + $0xf8] sm:$0xff]
    %v634 = vld [vmem:[#allocation8 + $0x100] sm:$0xff]
    %v635 = vld [vmem:[#allocation8 + $0x108] sm:$0xff]
    %v636 = vld [vmem:[#allocation8 + $0x110] sm:$0xff]
    %v637 = vld [vmem:[#allocation8 + $0x118] sm:$0xff]
    %v638 = vld [vmem:[#allocation8 + $0x120] sm:$0xff]
    %v639 = vld [vmem:[#allocation8 + $0x128] sm:$0xff]
    %v640 = vld [vmem:[#allocation8 + $0x130] sm:$0xff]
    %v641 = vld [vmem:[#allocation8 + $0x138] sm:$0xff]
    %v642 = vld [vmem:[#allocation8 + $0x140] sm:$0xff]
    %v643 = vld [vmem:[#allocation8 + $0x148] sm:$0xff]
    %v644 = vld [vmem:[#allocation8 + $0x150] sm:$0xff]
    %v645 = vld [vmem:[#allocation8 + $0x158] sm:$0xff]
    %v646 = vld [vmem:[#allocation8 + $0x160] sm:$0xff]
    %v647 = vld [vmem:[#allocation8 + $0x168] sm:$0xff]
    %v648 = vld [vmem:[#allocation8 + $0x170] sm:$0xff]
    %v649 = vld [vmem:[#allocation8 + $0x178] sm:$0xff]
    %v650 = vld [vmem:[#allocation8 + $0x180] sm:$0xff]
    %v651 = vld [vmem:[#allocation8 + $0x188] sm:$0xff]
    %v652 = vld [vmem:[#allocation8 + $0x190] sm:$0xff]
    %v653 = vld [vmem:[#allocation8 + $0x198] sm:$0xff]
    %v654 = vld [vmem:[#allocation8 + $0x1a0] sm:$0xff]
    %v655 = vld [vmem:[#allocation8 + $0x1a8] sm:$0xff]
    %v656 = vld [vmem:[#allocation8 + $0x1b0] sm:$0xff]
    %v657 = vld [vmem:[#allocation8 + $0x1b8] sm:$0xff]
    %v658 = vld [vmem:[#allocation8 + $0x1c0] sm:$0xff]
    %v659 = vld [vmem:[#allocation8 + $0x1c8] sm:$0xff]
    %v660 = vld [vmem:[#allocation8 + $0x1d0] sm:$0xff]
    %v661 = vld [vmem:[#allocation8 + $0x1d8] sm:$0xff]
    %v662 = vld [vmem:[#allocation8 + $0x1e0] sm:$0xff]
    %v663 = vld [vmem:[#allocation8 + $0x1e8] sm:$0xff]
    %v664 = vld [vmem:[#allocation8 + $0x1f0] sm:$0xff]
    %v665 = vld [vmem:[#allocation8 + $0x1f8] sm:$0xff]
    %v666 = vld [vmem:[#allocation8 + $0x200] sm:$0xff]
    %v667 = vld [vmem:[#allocation8 + $0x208] sm:$0xff]
    %v668 = vld [vmem:[#allocation8 + $0x210] sm:$0xff]
    %v669 = vld [vmem:[#allocation8 + $0x218] sm:$0xff]
    %v670 = vld [vmem:[#allocation8 + $0x220] sm:$0xff]
    %v671 = vld [vmem:[#allocation8 + $0x228] sm:$0xff]
    %v672 = vld [vmem:[#allocation8 + $0x230] sm:$0xff]
    %v673 = vld [vmem:[#allocation8 + $0x238] sm:$0xff]
    %v674 = vld [vmem:[#allocation8 + $0x240] sm:$0xff]
    %v675 = vld [vmem:[#allocation8 + $0x248] sm:$0xff]
    %v676 = vld [vmem:[#allocation8 + $0x250] sm:$0xff]
    %v677 = vld [vmem:[#allocation8 + $0x258] sm:$0xff]
    %v678 = vld [vmem:[#allocation8 + $0x260] sm:$0xff]
    %v679 = vld [vmem:[#allocation8 + $0x268] sm:$0xff]
    %v680 = vld [vmem:[#allocation8 + $0x270] sm:$0xff]
    %v681 = vld [vmem:[#allocation8 + $0x278] sm:$0xff]
    %v682 = vld [vmem:[#allocation8 + $0x280] sm:$0xff]
    %v683 = vld [vmem:[#allocation8 + $0x288] sm:$0xff]
    %v684 = vld [vmem:[#allocation8 + $0x290] sm:$0xff]
    %v685 = vld [vmem:[#allocation8 + $0x298] sm:$0xff]
    %v686 = vld [vmem:[#allocation8 + $0x2a0] sm:$0xff]
    %v687 = vld [vmem:[#allocation8 + $0x2a8] sm:$0xff]
    %v688 = vld [vmem:[#allocation8 + $0x2b0] sm:$0xff]
    %v689 = vld [vmem:[#allocation8 + $0x2b8] sm:$0xff]
    %v690 = vld [vmem:[#allocation8 + $0x2c0] sm:$0xff]
    %v691 = vld [vmem:[#allocation8 + $0x2c8] sm:$0xff]
    %v692 = vld [vmem:[#allocation8 + $0x2d0] sm:$0xff]
    %v693 = vld [vmem:[#allocation8 + $0x2d8] sm:$0xff]
    %v694 = vld [vmem:[#allocation8 + $0x2e0] sm:$0xff]
    %v695 = vld [vmem:[#allocation8 + $0x2e8] sm:$0xff]
    %v696 = vld [vmem:[#allocation8 + $0x2f0] sm:$0xff]
    %v697 = vld [vmem:[#allocation8 + $0x2f8] sm:$0xff]
    %v698 = vld [vmem:[#allocation8 + $0x300] sm:$0xff]
    %v699 = vld [vmem:[#allocation8 + $0x308] sm:$0xff]
    %v700 = vld [vmem:[#allocation8 + $0x310] sm:$0xff]
    %v701 = vld [vmem:[#allocation8 + $0x318] sm:$0xff]
    %v702 = vld [vmem:[#allocation8 + $0x320] sm:$0xff]
    %v703 = vld [vmem:[#allocation8 + $0x328] sm:$0xff]
    %v704 = vld [vmem:[#allocation8 + $0x330] sm:$0xff]
    %v705 = vld [vmem:[#allocation8 + $0x338] sm:$0xff]
    %v706 = vld [vmem:[#allocation8 + $0x340] sm:$0xff]
    %v707 = vld [vmem:[#allocation8 + $0x348] sm:$0xff]
    %v708 = vld [vmem:[#allocation8 + $0x350] sm:$0xff]
    %v709 = vld [vmem:[#allocation8 + $0x358] sm:$0xff]
    %v710 = vld [vmem:[#allocation8 + $0x360] sm:$0xff]
    %v711 = vld [vmem:[#allocation8 + $0x368] sm:$0xff]
    %v712 = vld [vmem:[#allocation8 + $0x370] sm:$0xff]
    %v713 = vld [vmem:[#allocation8 + $0x378] sm:$0xff]
    %v714 = vld [vmem:[#allocation8 + $0x380] sm:$0xff]
    %v715 = vld [vmem:[#allocation8 + $0x388] sm:$0xff]
    %v716 = vld [vmem:[#allocation8 + $0x390] sm:$0xff]
    %v717 = vld [vmem:[#allocation8 + $0x398] sm:$0xff]
    %v718 = vld [vmem:[#allocation8 + $0x3a0] sm:$0xff]
    %v719 = vld [vmem:[#allocation8 + $0x3a8] sm:$0xff]
    %v720 = vld [vmem:[#allocation8 + $0x3b0] sm:$0xff]
    %v721 = vld [vmem:[#allocation8 + $0x3b8] sm:$0xff]
    %v722 = vld [vmem:[#allocation8 + $0x3c0] sm:$0xff]
    %v723 = vld [vmem:[#allocation8 + $0x3c8] sm:$0xff]
    %v724 = vld [vmem:[#allocation8 + $0x3d0] sm:$0xff]
    %v725 = vld [vmem:[#allocation8 + $0x3d8] sm:$0xff]
    %v726 = vld [vmem:[#allocation8 + $0x3e0] sm:$0xff]
    %v727 = vld [vmem:[#allocation8 + $0x3e8] sm:$0xff]
    %v728 = vld [vmem:[#allocation8 + $0x3f0] sm:$0xff]
    %v729 = vld [vmem:[#allocation8 + $0x3f8] sm:$0xff]
    %v730 = vld [vmem:[%s4] sm:$0xf]
    %v859 = vunpack.c.l.b16 %v602
    %v860 = vunpack.c.h.b16 %v602
    %v861 = vunpack.c.l.b16 %v603
    %v862 = vunpack.c.h.b16 %v603
    %v863 = vunpack.c.l.b16 %v604
    %v864 = vunpack.c.h.b16 %v604
    %v865 = vunpack.c.l.b16 %v605
    %v866 = vunpack.c.h.b16 %v605
    %v867 = vunpack.c.l.b16 %v606
    %v868 = vunpack.c.h.b16 %v606
    %v869 = vunpack.c.l.b16 %v607
    %v870 = vunpack.c.h.b16 %v607
    %v871 = vunpack.c.l.b16 %v608
    %v872 = vunpack.c.h.b16 %v608
    %v873 = vunpack.c.l.b16 %v609
    %v874 = vunpack.c.h.b16 %v609
    %v875 = vunpack.c.l.b16 %v610
    %v876 = vunpack.c.h.b16 %v610
    %v877 = vunpack.c.l.b16 %v611
    %v878 = vunpack.c.h.b16 %v611
    %v879 = vunpack.c.l.b16 %v612
    %v880 = vunpack.c.h.b16 %v612
    %v881 = vunpack.c.l.b16 %v613
    %v882 = vunpack.c.h.b16 %v613
    %v883 = vunpack.c.l.b16 %v614
    %v884 = vunpack.c.h.b16 %v614
    %v885 = vunpack.c.l.b16 %v615
    %v886 = vunpack.c.h.b16 %v615
    %v887 = vunpack.c.l.b16 %v616
    %v888 = vunpack.c.h.b16 %v616
    %v889 = vunpack.c.l.b16 %v617
    %v890 = vunpack.c.h.b16 %v617
    %v891 = vunpack.c.l.b16 %v618
    %v892 = vunpack.c.h.b16 %v618
    %v893 = vunpack.c.l.b16 %v619
    %v894 = vunpack.c.h.b16 %v619
    %v895 = vunpack.c.l.b16 %v620
    %v896 = vunpack.c.h.b16 %v620
    %v897 = vunpack.c.l.b16 %v621
    %v898 = vunpack.c.h.b16 %v621
    %v899 = vunpack.c.l.b16 %v622
    %v900 = vunpack.c.h.b16 %v622
    %v901 = vunpack.c.l.b16 %v623
    %v902 = vunpack.c.h.b16 %v623
    %v903 = vunpack.c.l.b16 %v624
    %v904 = vunpack.c.h.b16 %v624
    %v905 = vunpack.c.l.b16 %v625
    %v906 = vunpack.c.h.b16 %v625
    %v907 = vunpack.c.l.b16 %v626
    %v908 = vunpack.c.h.b16 %v626
    %v909 = vunpack.c.l.b16 %v627
    %v910 = vunpack.c.h.b16 %v627
    %v911 = vunpack.c.l.b16 %v628
    %v912 = vunpack.c.h.b16 %v628
    %v913 = vunpack.c.l.b16 %v629
    %v914 = vunpack.c.h.b16 %v629
    %v915 = vunpack.c.l.b16 %v630
    %v916 = vunpack.c.h.b16 %v630
    %v917 = vunpack.c.l.b16 %v631
    %v918 = vunpack.c.h.b16 %v631
    %v919 = vunpack.c.l.b16 %v632
    %v920 = vunpack.c.h.b16 %v632
    %v921 = vunpack.c.l.b16 %v633
    %v922 = vunpack.c.h.b16 %v633
    %v923 = vunpack.c.l.b16 %v634
    %v924 = vunpack.c.h.b16 %v634
    %v925 = vunpack.c.l.b16 %v635
    %v926 = vunpack.c.h.b16 %v635
    %v927 = vunpack.c.l.b16 %v636
    %v928 = vunpack.c.h.b16 %v636
    %v929 = vunpack.c.l.b16 %v637
    %v930 = vunpack.c.h.b16 %v637
    %v931 = vunpack.c.l.b16 %v638
    %v932 = vunpack.c.h.b16 %v638
    %v933 = vunpack.c.l.b16 %v639
    %v934 = vunpack.c.h.b16 %v639
    %v935 = vunpack.c.l.b16 %v640
    %v936 = vunpack.c.h.b16 %v640
    %v937 = vunpack.c.l.b16 %v641
    %v938 = vunpack.c.h.b16 %v641
    %v939 = vunpack.c.l.b16 %v642
    %v940 = vunpack.c.h.b16 %v642
    %v941 = vunpack.c.l.b16 %v643
    %v942 = vunpack.c.h.b16 %v643
    %v943 = vunpack.c.l.b16 %v644
    %v944 = vunpack.c.h.b16 %v644
    %v945 = vunpack.c.l.b16 %v645
    %v946 = vunpack.c.h.b16 %v645
    %v947 = vunpack.c.l.b16 %v646
    %v948 = vunpack.c.h.b16 %v646
    %v949 = vunpack.c.l.b16 %v647
    %v950 = vunpack.c.h.b16 %v647
    %v951 = vunpack.c.l.b16 %v648
    %v952 = vunpack.c.h.b16 %v648
    %v953 = vunpack.c.l.b16 %v649
    %v954 = vunpack.c.h.b16 %v649
    %v955 = vunpack.c.l.b16 %v650
    %v956 = vunpack.c.h.b16 %v650
    %v957 = vunpack.c.l.b16 %v651
    %v958 = vunpack.c.h.b16 %v651
    %v959 = vunpack.c.l.b16 %v652
    %v960 = vunpack.c.h.b16 %v652
    %v961 = vunpack.c.l.b16 %v653
    %v962 = vunpack.c.h.b16 %v653
    %v963 = vunpack.c.l.b16 %v654
    %v964 = vunpack.c.h.b16 %v654
    %v965 = vunpack.c.l.b16 %v655
    %v966 = vunpack.c.h.b16 %v655
    %v967 = vunpack.c.l.b16 %v656
    %v968 = vunpack.c.h.b16 %v656
    %v969 = vunpack.c.l.b16 %v657
    %v970 = vunpack.c.h.b16 %v657
    %v971 = vunpack.c.l.b16 %v658
    %v972 = vunpack.c.h.b16 %v658
    %v973 = vunpack.c.l.b16 %v659
    %v974 = vunpack.c.h.b16 %v659
    %v975 = vunpack.c.l.b16 %v660
    %v976 = vunpack.c.h.b16 %v660
    %v977 = vunpack.c.l.b16 %v661
    %v978 = vunpack.c.h.b16 %v661
    %v979 = vunpack.c.l.b16 %v662
    %v980 = vunpack.c.h.b16 %v662
    %v981 = vunpack.c.l.b16 %v663
    %v982 = vunpack.c.h.b16 %v663
    %v983 = vunpack.c.l.b16 %v664
    %v984 = vunpack.c.h.b16 %v664
    %v985 = vunpack.c.l.b16 %v665
    %v986 = vunpack.c.h.b16 %v665
    %v987 = vunpack.c.l.b16 %v666
    %v988 = vunpack.c.h.b16 %v666
    %v989 = vunpack.c.l.b16 %v667
    %v990 = vunpack.c.h.b16 %v667
    %v991 = vunpack.c.l.b16 %v668
    %v992 = vunpack.c.h.b16 %v668
    %v993 = vunpack.c.l.b16 %v669
    %v994 = vunpack.c.h.b16 %v669
    %v995 = vunpack.c.l.b16 %v670
    %v996 = vunpack.c.h.b16 %v670
    %v997 = vunpack.c.l.b16 %v671
    %v998 = vunpack.c.h.b16 %v671
    %v999 = vunpack.c.l.b16 %v672
    %v1000 = vunpack.c.h.b16 %v672
    %v1001 = vunpack.c.l.b16 %v673
    %v1002 = vunpack.c.h.b16 %v673
    %v1003 = vunpack.c.l.b16 %v674
    %v1004 = vunpack.c.h.b16 %v674
    %v1005 = vunpack.c.l.b16 %v675
    %v1006 = vunpack.c.h.b16 %v675
    %v1007 = vunpack.c.l.b16 %v676
    %v1008 = vunpack.c.h.b16 %v676
    %v1009 = vunpack.c.l.b16 %v677
    %v1010 = vunpack.c.h.b16 %v677
    %v1011 = vunpack.c.l.b16 %v678
    %v1012 = vunpack.c.h.b16 %v678
    %v1013 = vunpack.c.l.b16 %v679
    %v1014 = vunpack.c.h.b16 %v679
    %v1015 = vunpack.c.l.b16 %v680
    %v1016 = vunpack.c.h.b16 %v680
    %v1017 = vunpack.c.l.b16 %v681
    %v1018 = vunpack.c.h.b16 %v681
    %v1019 = vunpack.c.l.b16 %v682
    %v1020 = vunpack.c.h.b16 %v682
    %v1021 = vunpack.c.l.b16 %v683
    %v1022 = vunpack.c.h.b16 %v683
    %v1023 = vunpack.c.l.b16 %v684
    %v1024 = vunpack.c.h.b16 %v684
    %v1025 = vunpack.c.l.b16 %v685
    %v1026 = vunpack.c.h.b16 %v685
    %v1027 = vunpack.c.l.b16 %v686
    %v1028 = vunpack.c.h.b16 %v686
    %v1029 = vunpack.c.l.b16 %v687
    %v1030 = vunpack.c.h.b16 %v687
    %v1031 = vunpack.c.l.b16 %v688
    %v1032 = vunpack.c.h.b16 %v688
    %v1033 = vunpack.c.l.b16 %v689
    %v1034 = vunpack.c.h.b16 %v689
    %v1035 = vunpack.c.l.b16 %v690
    %v1036 = vunpack.c.h.b16 %v690
    %v1037 = vunpack.c.l.b16 %v691
    %v1038 = vunpack.c.h.b16 %v691
    %v1039 = vunpack.c.l.b16 %v692
    %v1040 = vunpack.c.h.b16 %v692
    %v1041 = vunpack.c.l.b16 %v693
    %v1042 = vunpack.c.h.b16 %v693
    %v1043 = vunpack.c.l.b16 %v694
    %v1044 = vunpack.c.h.b16 %v694
    %v1045 = vunpack.c.l.b16 %v695
    %v1046 = vunpack.c.h.b16 %v695
    %v1047 = vunpack.c.l.b16 %v696
    %v1048 = vunpack.c.h.b16 %v696
    %v1049 = vunpack.c.l.b16 %v697
    %v1050 = vunpack.c.h.b16 %v697
    %v1051 = vunpack.c.l.b16 %v698
    %v1052 = vunpack.c.h.b16 %v698
    %v1053 = vunpack.c.l.b16 %v699
    %v1054 = vunpack.c.h.b16 %v699
    %v1055 = vunpack.c.l.b16 %v700
    %v1056 = vunpack.c.h.b16 %v700
    %v1057 = vunpack.c.l.b16 %v701
    %v1058 = vunpack.c.h.b16 %v701
    %v1059 = vunpack.c.l.b16 %v702
    %v1060 = vunpack.c.h.b16 %v702
    %v1061 = vunpack.c.l.b16 %v703
    %v1062 = vunpack.c.h.b16 %v703
    %v1063 = vunpack.c.l.b16 %v704
    %v1064 = vunpack.c.h.b16 %v704
    %v1065 = vunpack.c.l.b16 %v705
    %v1066 = vunpack.c.h.b16 %v705
    %v1067 = vunpack.c.l.b16 %v706
    %v1068 = vunpack.c.h.b16 %v706
    %v1069 = vunpack.c.l.b16 %v707
    %v1070 = vunpack.c.h.b16 %v707
    %v1071 = vunpack.c.l.b16 %v708
    %v1072 = vunpack.c.h.b16 %v708
    %v1073 = vunpack.c.l.b16 %v709
    %v1074 = vunpack.c.h.b16 %v709
    %v1075 = vunpack.c.l.b16 %v710
    %v1076 = vunpack.c.h.b16 %v710
    %v1077 = vunpack.c.l.b16 %v711
    %v1078 = vunpack.c.h.b16 %v711
    %v1079 = vunpack.c.l.b16 %v712
    %v1080 = vunpack.c.h.b16 %v712
    %v1081 = vunpack.c.l.b16 %v713
    %v1082 = vunpack.c.h.b16 %v713
    %v1083 = vunpack.c.l.b16 %v714
    %v1084 = vunpack.c.h.b16 %v714
    %v1085 = vunpack.c.l.b16 %v715
    %v1086 = vunpack.c.h.b16 %v715
    %v1087 = vunpack.c.l.b16 %v716
    %v1088 = vunpack.c.h.b16 %v716
    %v1089 = vunpack.c.l.b16 %v717
    %v1090 = vunpack.c.h.b16 %v717
    %v1091 = vunpack.c.l.b16 %v718
    %v1092 = vunpack.c.h.b16 %v718
    %v1093 = vunpack.c.l.b16 %v719
    %v1094 = vunpack.c.h.b16 %v719
    %v1095 = vunpack.c.l.b16 %v720
    %v1096 = vunpack.c.h.b16 %v720
    %v1097 = vunpack.c.l.b16 %v721
    %v1098 = vunpack.c.h.b16 %v721
    %v1099 = vunpack.c.l.b16 %v722
    %v1100 = vunpack.c.h.b16 %v722
    %v1101 = vunpack.c.l.b16 %v723
    %v1102 = vunpack.c.h.b16 %v723
    %v1103 = vunpack.c.l.b16 %v724
    %v1104 = vunpack.c.h.b16 %v724
    %v1105 = vunpack.c.l.b16 %v725
    %v1106 = vunpack.c.h.b16 %v725
    %v1107 = vunpack.c.l.b16 %v726
    %v1108 = vunpack.c.h.b16 %v726
    %v1109 = vunpack.c.l.b16 %v727
    %v1110 = vunpack.c.h.b16 %v727
    %v1111 = vunpack.c.l.b16 %v728
    %v1112 = vunpack.c.h.b16 %v728
    %v1113 = vunpack.c.l.b16 %v729
    %v1114 = vunpack.c.h.b16 %v729
    %v1115 = vpack.c.b16 %v863, %v859
    %v1116 = vpack.c.b16 %v864, %v860
    %v1117 = vpack.c.b16 %v865, %v861
    %v1118 = vpack.c.b16 %v866, %v862
    %v1119 = vpack.c.b16 %v871, %v867
    %v1120 = vpack.c.b16 %v872, %v868
    %v1121 = vpack.c.b16 %v873, %v869
    %v1122 = vpack.c.b16 %v874, %v870
    %v1123 = vpack.c.b16 %v879, %v875
    %v1124 = vpack.c.b16 %v880, %v876
    %v1125 = vpack.c.b16 %v881, %v877
    %v1126 = vpack.c.b16 %v882, %v878
    %v1127 = vpack.c.b16 %v887, %v883
    %v1128 = vpack.c.b16 %v888, %v884
    %v1129 = vpack.c.b16 %v889, %v885
    %v1130 = vpack.c.b16 %v890, %v886
    %v1131 = vpack.c.b16 %v895, %v891
    %v1132 = vpack.c.b16 %v896, %v892
    %v1133 = vpack.c.b16 %v897, %v893
    %v1134 = vpack.c.b16 %v898, %v894
    %v1135 = vpack.c.b16 %v903, %v899
    %v1136 = vpack.c.b16 %v904, %v900
    %v1137 = vpack.c.b16 %v905, %v901
    %v1138 = vpack.c.b16 %v906, %v902
    %v1139 = vpack.c.b16 %v911, %v907
    %v1140 = vpack.c.b16 %v912, %v908
    %v1141 = vpack.c.b16 %v913, %v909
    %v1142 = vpack.c.b16 %v914, %v910
    %v1143 = vpack.c.b16 %v919, %v915
    %v1144 = vpack.c.b16 %v920, %v916
    %v1145 = vpack.c.b16 %v921, %v917
    %v1146 = vpack.c.b16 %v922, %v918
    %v1147 = vpack.c.b16 %v927, %v923
    %v1148 = vpack.c.b16 %v928, %v924
    %v1149 = vpack.c.b16 %v929, %v925
    %v1150 = vpack.c.b16 %v930, %v926
    %v1151 = vpack.c.b16 %v935, %v931
    %v1152 = vpack.c.b16 %v936, %v932
    %v1153 = vpack.c.b16 %v937, %v933
    %v1154 = vpack.c.b16 %v938, %v934
    %v1155 = vpack.c.b16 %v943, %v939
    %v1156 = vpack.c.b16 %v944, %v940
    %v1157 = vpack.c.b16 %v945, %v941
    %v1158 = vpack.c.b16 %v946, %v942
    %v1159 = vpack.c.b16 %v951, %v947
    %v1160 = vpack.c.b16 %v952, %v948
    %v1161 = vpack.c.b16 %v953, %v949
    %v1162 = vpack.c.b16 %v954, %v950
    %v1163 = vpack.c.b16 %v959, %v955
    %v1164 = vpack.c.b16 %v960, %v956
    %v1165 = vpack.c.b16 %v961, %v957
    %v1166 = vpack.c.b16 %v962, %v958
    %v1167 = vpack.c.b16 %v967, %v963
    %v1168 = vpack.c.b16 %v968, %v964
    %v1169 = vpack.c.b16 %v969, %v965
    %v1170 = vpack.c.b16 %v970, %v966
    %v1171 = vpack.c.b16 %v975, %v971
    %v1172 = vpack.c.b16 %v976, %v972
    %v1173 = vpack.c.b16 %v977, %v973
    %v1174 = vpack.c.b16 %v978, %v974
    %v1175 = vpack.c.b16 %v983, %v979
    %v1176 = vpack.c.b16 %v984, %v980
    %v1177 = vpack.c.b16 %v985, %v981
    %v1178 = vpack.c.b16 %v986, %v982
    %v1179 = vpack.c.b16 %v991, %v987
    %v1180 = vpack.c.b16 %v992, %v988
    %v1181 = vpack.c.b16 %v993, %v989
    %v1182 = vpack.c.b16 %v994, %v990
    %v1183 = vpack.c.b16 %v999, %v995
    %v1184 = vpack.c.b16 %v1000, %v996
    %v1185 = vpack.c.b16 %v1001, %v997
    %v1186 = vpack.c.b16 %v1002, %v998
    %v1187 = vpack.c.b16 %v1007, %v1003
    %v1188 = vpack.c.b16 %v1008, %v1004
    %v1189 = vpack.c.b16 %v1009, %v1005
    %v1190 = vpack.c.b16 %v1010, %v1006
    %v1191 = vpack.c.b16 %v1015, %v1011
    %v1192 = vpack.c.b16 %v1016, %v1012
    %v1193 = vpack.c.b16 %v1017, %v1013
    %v1194 = vpack.c.b16 %v1018, %v1014
    %v1195 = vpack.c.b16 %v1023, %v1019
    %v1196 = vpack.c.b16 %v1024, %v1020
    %v1197 = vpack.c.b16 %v1025, %v1021
    %v1198 = vpack.c.b16 %v1026, %v1022
    %v1199 = vpack.c.b16 %v1031, %v1027
    %v1200 = vpack.c.b16 %v1032, %v1028
    %v1201 = vpack.c.b16 %v1033, %v1029
    %v1202 = vpack.c.b16 %v1034, %v1030
    %v1203 = vpack.c.b16 %v1039, %v1035
    %v1204 = vpack.c.b16 %v1040, %v1036
    %v1205 = vpack.c.b16 %v1041, %v1037
    %v1206 = vpack.c.b16 %v1042, %v1038
    %v1207 = vpack.c.b16 %v1047, %v1043
    %v1208 = vpack.c.b16 %v1048, %v1044
    %v1209 = vpack.c.b16 %v1049, %v1045
    %v1210 = vpack.c.b16 %v1050, %v1046
    %v1211 = vpack.c.b16 %v1055, %v1051
    %v1212 = vpack.c.b16 %v1056, %v1052
    %v1213 = vpack.c.b16 %v1057, %v1053
    %v1214 = vpack.c.b16 %v1058, %v1054
    %v1215 = vpack.c.b16 %v1063, %v1059
    %v1216 = vpack.c.b16 %v1064, %v1060
    %v1217 = vpack.c.b16 %v1065, %v1061
    %v1218 = vpack.c.b16 %v1066, %v1062
    %v1219 = vpack.c.b16 %v1071, %v1067
    %v1220 = vpack.c.b16 %v1072, %v1068
    %v1221 = vpack.c.b16 %v1073, %v1069
    %v1222 = vpack.c.b16 %v1074, %v1070
    %v1223 = vpack.c.b16 %v1079, %v1075
    %v1224 = vpack.c.b16 %v1080, %v1076
    %v1225 = vpack.c.b16 %v1081, %v1077
    %v1226 = vpack.c.b16 %v1082, %v1078
    %v1227 = vpack.c.b16 %v1087, %v1083
    %v1228 = vpack.c.b16 %v1088, %v1084
    %v1229 = vpack.c.b16 %v1089, %v1085
    %v1230 = vpack.c.b16 %v1090, %v1086
    %v1231 = vpack.c.b16 %v1095, %v1091
    %v1232 = vpack.c.b16 %v1096, %v1092
    %v1233 = vpack.c.b16 %v1097, %v1093
    %v1234 = vpack.c.b16 %v1098, %v1094
    %v1235 = vpack.c.b16 %v1103, %v1099
    %v1236 = vpack.c.b16 %v1104, %v1100
    %v1237 = vpack.c.b16 %v1105, %v1101
    %v1238 = vpack.c.b16 %v1106, %v1102
    %v1239 = vpack.c.b16 %v1111, %v1107
    %v1240 = vpack.c.b16 %v1112, %v1108
    %v1241 = vpack.c.b16 %v1113, %v1109
    %v1242 = vpack.c.b16 %v1114, %v1110
    %v1372 = vlaneseq
    %v1373 = vshrl.u32 %v1372, 7
    %v1374 = vsub.s32 0, %v1373
    %v1375 = vrot.slane %v730, %v1374
    %v1376 = vlaneseq
    %v1377 = vshrl.u32 %v1376, 7
    %v1378 = vsub.s32 1, %v1377
    %v1379 = vrot.slane %v730, %v1378
    %v1380 = vlaneseq
    %v1381 = vshrl.u32 %v1380, 7
    %v1382 = vsub.s32 2, %v1381
    %v1383 = vrot.slane %v730, %v1382
    %v1384 = vlaneseq
    %v1385 = vshrl.u32 %v1384, 7
    %v1386 = vsub.s32 3, %v1385
    %v1387 = vrot.slane %v730, %v1386
    %1392 = vmatprep.subr.bf16.mxu0 %v1144
    %1393 = vmatpush1.bf16.msra.mxu0 %v1143
    %1394 = vmatprep.subr.bf16.mxu0 %v1140
    %1395 = vmatpush1.bf16.msra.mxu0 %v1139
    %1396 = vmatprep.subr.bf16.mxu0 %v1136
    %1397 = vmatpush1.bf16.msra.mxu0 %v1135
    %1398 = vmatprep.subr.bf16.mxu0 %v1132
    %1399 = vmatpush1.bf16.msra.mxu0 %v1131
    %1400 = vmatprep.subr.bf16.mxu0 %v1128
    %1401 = vmatpush1.bf16.msra.mxu0 %v1127
    %1402 = vmatprep.subr.bf16.mxu0 %v1124
    %1403 = vmatpush1.bf16.msra.mxu0 %v1123
    %1404 = vmatprep.subr.bf16.mxu0 %v1120
    %1405 = vmatpush1.bf16.msra.mxu0 %v1119
    %1406 = vmatprep.subr.bf16.mxu0 %v1116
    %1407 = vmatpush1.bf16.msra.mxu0 %v1115
    %1408 = vmatprep.subr.bf16.mxu0 %v1176
    %1409 = vmatpush2.bf16.msra.mxu0 %v1175
    %1410 = vmatprep.subr.bf16.mxu0 %v1172
    %1411 = vmatpush2.bf16.msra.mxu0 %v1171
    %1412 = vmatprep.subr.bf16.mxu0 %v1168
    %1413 = vmatpush2.bf16.msra.mxu0 %v1167
    %1414 = vmatprep.subr.bf16.mxu0 %v1164
    %1415 = vmatpush2.bf16.msra.mxu0 %v1163
    %1416 = vmatprep.subr.bf16.mxu0 %v1160
    %1417 = vmatpush2.bf16.msra.mxu0 %v1159
    %1418 = vmatprep.subr.bf16.mxu0 %v1156
    %1419 = vmatpush2.bf16.msra.mxu0 %v1155
    %1420 = vmatprep.subr.bf16.mxu0 %v1152
    %1421 = vmatpush2.bf16.msra.mxu0 %v1151
    %1422 = vmatprep.subr.bf16.mxu0 %v1148
    %1423 = vmatpush2.bf16.msra.mxu0 %v1147
    %1424 = vmatprep.mubr.bf16.mxu0 %v599
    %1425 = vmatmul.mubr.bf16.gmra.mxu0 %v598
    %v1426 = vpop.f32.mrf.mxu0
    %v1427 = vadd.f32 %v1375, %v1426
    %v1428 = vpop.f32.mrf.mxu0
    %v1429 = vadd.f32 %v1379, %v1428
    %v1430 = vpop.f32.mrf.mxu0
    %v1431 = vpop.f32.mrf.mxu0
    %1432 = vdwg.mxu0
    %1433 = vmatprep.subr.bf16.mxu0 %v1208
    %1434 = vmatpush1.bf16.msra.mxu0 %v1207
    %1435 = vmatprep.subr.bf16.mxu0 %v1204
    %1436 = vmatpush1.bf16.msra.mxu0 %v1203
    %1437 = vmatprep.subr.bf16.mxu0 %v1200
    %1438 = vmatpush1.bf16.msra.mxu0 %v1199
    %1439 = vmatprep.subr.bf16.mxu0 %v1196
    %1440 = vmatpush1.bf16.msra.mxu0 %v1195
    %1441 = vmatprep.subr.bf16.mxu0 %v1192
    %1442 = vmatpush1.bf16.msra.mxu0 %v1191
    %1443 = vmatprep.subr.bf16.mxu0 %v1188
    %1444 = vmatpush1.bf16.msra.mxu0 %v1187
    %1445 = vmatprep.subr.bf16.mxu0 %v1184
    %1446 = vmatpush1.bf16.msra.mxu0 %v1183
    %1447 = vmatprep.subr.bf16.mxu0 %v1180
    %1448 = vmatpush1.bf16.msra.mxu0 %v1179
    %1449 = vmatprep.subr.bf16.mxu0 %v1240
    %1450 = vmatpush2.bf16.msra.mxu0 %v1239
    %1451 = vmatprep.subr.bf16.mxu0 %v1236
    %1452 = vmatpush2.bf16.msra.mxu0 %v1235
    %1453 = vmatprep.subr.bf16.mxu0 %v1232
    %1454 = vmatpush2.bf16.msra.mxu0 %v1231
    %1455 = vmatprep.subr.bf16.mxu0 %v1228
    %1456 = vmatpush2.bf16.msra.mxu0 %v1227
    %1457 = vmatprep.subr.bf16.mxu0 %v1224
    %1458 = vmatpush2.bf16.msra.mxu0 %v1223
    %1459 = vmatprep.subr.bf16.mxu0 %v1220
    %1460 = vmatpush2.bf16.msra.mxu0 %v1219
    %1461 = vmatprep.subr.bf16.mxu0 %v1216
    %1462 = vmatpush2.bf16.msra.mxu0 %v1215
    %1463 = vmatprep.subr.bf16.mxu0 %v1212
    %1464 = vmatpush2.bf16.msra.mxu0 %v1211
    %1465 = vmatprep.mubr.bf16.mxu0 %v601
    %1466 = vmatmul.mubr.bf16.gmra.mxu0 %v600
    %v1467 = vpop.f32.mrf.mxu0
    %v1468 = vadd.f32 %v1427, %v1467
    %v1469 = vpop.f32.mrf.mxu0
    %v1470 = vadd.f32 %v1429, %v1469
    %v1471 = vpop.f32.mrf.mxu0
    %v1472 = vpop.f32.mrf.mxu0
    %1473 = vdwg.mxu0
    %1474 = vmatprep.subr.bf16.mxu0 %v1146
    %1475 = vmatpush1.bf16.msra.mxu0 %v1145
    %1476 = vmatprep.subr.bf16.mxu0 %v1142
    %1477 = vmatpush1.bf16.msra.mxu0 %v1141
    %1478 = vmatprep.subr.bf16.mxu0 %v1138
    %1479 = vmatpush1.bf16.msra.mxu0 %v1137
    %1480 = vmatprep.subr.bf16.mxu0 %v1134
    %1481 = vmatpush1.bf16.msra.mxu0 %v1133
    %1482 = vmatprep.subr.bf16.mxu0 %v1130
    %1483 = vmatpush1.bf16.msra.mxu0 %v1129
    %1484 = vmatprep.subr.bf16.mxu0 %v1126
    %1485 = vmatpush1.bf16.msra.mxu0 %v1125
    %1486 = vmatprep.subr.bf16.mxu0 %v1122
    %1487 = vmatpush1.bf16.msra.mxu0 %v1121
    %1488 = vmatprep.subr.bf16.mxu0 %v1118
    %1489 = vmatpush1.bf16.msra.mxu0 %v1117
    %1490 = vmatprep.subr.bf16.mxu0 %v1178
    %1491 = vmatpush2.bf16.msra.mxu0 %v1177
    %1492 = vmatprep.subr.bf16.mxu0 %v1174
    %1493 = vmatpush2.bf16.msra.mxu0 %v1173
    %1494 = vmatprep.subr.bf16.mxu0 %v1170
    %1495 = vmatpush2.bf16.msra.mxu0 %v1169
    %1496 = vmatprep.subr.bf16.mxu0 %v1166
    %1497 = vmatpush2.bf16.msra.mxu0 %v1165
    %1498 = vmatprep.subr.bf16.mxu0 %v1162
    %1499 = vmatpush2.bf16.msra.mxu0 %v1161
    %1500 = vmatprep.subr.bf16.mxu0 %v1158
    %1501 = vmatpush2.bf16.msra.mxu0 %v1157
    %1502 = vmatprep.subr.bf16.mxu0 %v1154
    %1503 = vmatpush2.bf16.msra.mxu0 %v1153
    %1504 = vmatprep.subr.bf16.mxu0 %v1150
    %1505 = vmatpush2.bf16.msra.mxu0 %v1149
    %1506 = vmatprep.mubr.bf16.mxu0 %v599
    %1507 = vmatmul.mubr.bf16.gmra.mxu0 %v598
    %v1508 = vpop.f32.mrf.mxu0
    %v1509 = vadd.f32 %v1383, %v1508
    %v1510 = vpop.f32.mrf.mxu0
    %v1511 = vadd.f32 %v1387, %v1510
    %v1512 = vpop.f32.mrf.mxu0
    %v1513 = vpop.f32.mrf.mxu0
    %1514 = vdwg.mxu0
    %1515 = vmatprep.subr.bf16.mxu0 %v1210
    %1516 = vmatpush1.bf16.msra.mxu0 %v1209
    %1517 = vmatprep.subr.bf16.mxu0 %v1206
    %1518 = vmatpush1.bf16.msra.mxu0 %v1205
    %1519 = vmatprep.subr.bf16.mxu0 %v1202
    %1520 = vmatpush1.bf16.msra.mxu0 %v1201
    %1521 = vmatprep.subr.bf16.mxu0 %v1198
    %1522 = vmatpush1.bf16.msra.mxu0 %v1197
    %1523 = vmatprep.subr.bf16.mxu0 %v1194
    %1524 = vmatpush1.bf16.msra.mxu0 %v1193
    %1525 = vmatprep.subr.bf16.mxu0 %v1190
    %1526 = vmatpush1.bf16.msra.mxu0 %v1189
    %1527 = vmatprep.subr.bf16.mxu0 %v1186
    %1528 = vmatpush1.bf16.msra.mxu0 %v1185
    %1529 = vmatprep.subr.bf16.mxu0 %v1182
    %1530 = vmatpush1.bf16.msra.mxu0 %v1181
    %1531 = vmatprep.subr.bf16.mxu0 %v1242
    %1532 = vmatpush2.bf16.msra.mxu0 %v1241
    %1533 = vmatprep.subr.bf16.mxu0 %v1238
    %1534 = vmatpush2.bf16.msra.mxu0 %v1237
    %1535 = vmatprep.subr.bf16.mxu0 %v1234
    %1536 = vmatpush2.bf16.msra.mxu0 %v1233
    %1537 = vmatprep.subr.bf16.mxu0 %v1230
    %1538 = vmatpush2.bf16.msra.mxu0 %v1229
    %1539 = vmatprep.subr.bf16.mxu0 %v1226
    %1540 = vmatpush2.bf16.msra.mxu0 %v1225
    %1541 = vmatprep.subr.bf16.mxu0 %v1222
    %1542 = vmatpush2.bf16.msra.mxu0 %v1221
    %1543 = vmatprep.subr.bf16.mxu0 %v1218
    %1544 = vmatpush2.bf16.msra.mxu0 %v1217
    %1545 = vmatprep.subr.bf16.mxu0 %v1214
    %1546 = vmatpush2.bf16.msra.mxu0 %v1213
    %1547 = vmatprep.mubr.bf16.mxu0 %v601
    %1548 = vmatmul.mubr.bf16.gmra.mxu0 %v600
    %v1549 = vpop.f32.mrf.mxu0
    %v1550 = vadd.f32 %v1509, %v1549
    %v1551 = vpop.f32.mrf.mxu0
    %v1552 = vadd.f32 %v1511, %v1551
    %v1553 = vpop.f32.mrf.mxu0
    %v1554 = vpop.f32.mrf.mxu0
    %1555 = vdwg.mxu0
    %v1556 = vmax.f32 %v1468, 0.0
    %v1557 = vmax.f32 %v1470, 0.0
    %v1558 = vmax.f32 %v1550, 0.0
    %v1559 = vmax.f32 %v1552, 0.0
    %v1560 = vpack.c.bf16 %v1556, %v1556
    %v1561 = vpack.c.bf16 %v1557, %v1557
    %v1562 = vpack.c.bf16 %v1558, %v1558
    %v1563 = vpack.c.bf16 %v1559, %v1559
    %v1564 = vld [vmem:[#allocation10] sm:$0xf]
    %v1565 = vld [vmem:[#allocation10 + $0x4] sm:$0xf]
    %v1566 = vld [vmem:[#allocation10 + $0x8] sm:$0xf]
    %v1567 = vld [vmem:[#allocation10 + $0xc] sm:$0xf]
    %v1568 = vld [vmem:[#allocation10 + $0x10] sm:$0xf]
    %v1569 = vld [vmem:[#allocation10 + $0x14] sm:$0xf]
    %v1570 = vld [vmem:[#allocation10 + $0x18] sm:$0xf]
    %v1571 = vld [vmem:[#allocation10 + $0x1c] sm:$0xf]
    %v1572 = vld [vmem:[#allocation10 + $0x20] sm:$0xf]
    %v1573 = vld [vmem:[#allocation10 + $0x24] sm:$0xf]
    %v1574 = vld [vmem:[#allocation10 + $0x28] sm:$0xf]
    %v1575 = vld [vmem:[#allocation10 + $0x2c] sm:$0xf]
    %v1576 = vld [vmem:[#allocation10 + $0x30] sm:$0xf]
    %v1577 = vld [vmem:[#allocation10 + $0x34] sm:$0xf]
    %v1578 = vld [vmem:[#allocation10 + $0x38] sm:$0xf]
    %v1579 = vld [vmem:[#allocation10 + $0x3c] sm:$0xf]
    %v1580 = vld [vmem:[#allocation10 + $0x40] sm:$0xf]
    %v1581 = vld [vmem:[#allocation10 + $0x44] sm:$0xf]
    %v1582 = vld [vmem:[#allocation10 + $0x48] sm:$0xf]
    %v1583 = vld [vmem:[#allocation10 + $0x4c] sm:$0xf]
    %v1584 = vld [vmem:[#allocation10 + $0x50] sm:$0xf]
    %v1585 = vld [vmem:[#allocation10 + $0x54] sm:$0xf]
    %v1586 = vld [vmem:[#allocation10 + $0x58] sm:$0xf]
    %v1587 = vld [vmem:[#allocation10 + $0x5c] sm:$0xf]
    %v1588 = vld [vmem:[#allocation10 + $0x60] sm:$0xf]
    %v1589 = vld [vmem:[#allocation10 + $0x64] sm:$0xf]
    %v1590 = vld [vmem:[#allocation10 + $0x68] sm:$0xf]
    %v1591 = vld [vmem:[#allocation10 + $0x6c] sm:$0xf]
    %v1592 = vld [vmem:[#allocation10 + $0x70] sm:$0xf]
    %v1593 = vld [vmem:[#allocation10 + $0x74] sm:$0xf]
    %v1594 = vld [vmem:[#allocation10 + $0x78] sm:$0xf]
    %v1595 = vld [vmem:[#allocation10 + $0x7c] sm:$0xf]
    %v1596 = vld [vmem:[#allocation10 + $0x80] sm:$0xf]
    %v1597 = vld [vmem:[#allocation10 + $0x84] sm:$0xf]
    %v1598 = vld [vmem:[#allocation10 + $0x88] sm:$0xf]
    %v1599 = vld [vmem:[#allocation10 + $0x8c] sm:$0xf]
    %v1600 = vld [vmem:[#allocation10 + $0x90] sm:$0xf]
    %v1601 = vld [vmem:[#allocation10 + $0x94] sm:$0xf]
    %v1602 = vld [vmem:[#allocation10 + $0x98] sm:$0xf]
    %v1603 = vld [vmem:[#allocation10 + $0x9c] sm:$0xf]
    %v1604 = vld [vmem:[#allocation10 + $0xa0] sm:$0xf]
    %v1605 = vld [vmem:[#allocation10 + $0xa4] sm:$0xf]
    %v1606 = vld [vmem:[#allocation10 + $0xa8] sm:$0xf]
    %v1607 = vld [vmem:[#allocation10 + $0xac] sm:$0xf]
    %v1608 = vld [vmem:[#allocation10 + $0xb0] sm:$0xf]
    %v1609 = vld [vmem:[#allocation10 + $0xb4] sm:$0xf]
    %v1610 = vld [vmem:[#allocation10 + $0xb8] sm:$0xf]
    %v1611 = vld [vmem:[#allocation10 + $0xbc] sm:$0xf]
    %v1612 = vld [vmem:[#allocation10 + $0xc0] sm:$0xf]
    %v1613 = vld [vmem:[#allocation10 + $0xc4] sm:$0xf]
    %v1614 = vld [vmem:[#allocation10 + $0xc8] sm:$0xf]
    %v1615 = vld [vmem:[#allocation10 + $0xcc] sm:$0xf]
    %v1616 = vld [vmem:[#allocation10 + $0xd0] sm:$0xf]
    %v1617 = vld [vmem:[#allocation10 + $0xd4] sm:$0xf]
    %v1618 = vld [vmem:[#allocation10 + $0xd8] sm:$0xf]
    %v1619 = vld [vmem:[#allocation10 + $0xdc] sm:$0xf]
    %v1620 = vld [vmem:[#allocation10 + $0xe0] sm:$0xf]
    %v1621 = vld [vmem:[#allocation10 + $0xe4] sm:$0xf]
    %v1622 = vld [vmem:[#allocation10 + $0xe8] sm:$0xf]
    %v1623 = vld [vmem:[#allocation10 + $0xec] sm:$0xf]
    %v1624 = vld [vmem:[#allocation10 + $0xf0] sm:$0xf]
    %v1625 = vld [vmem:[#allocation10 + $0xf4] sm:$0xf]
    %v1626 = vld [vmem:[#allocation10 + $0xf8] sm:$0xf]
    %v1627 = vld [vmem:[#allocation10 + $0xfc] sm:$0xf]
    %v1628 = vld [vmem:[%s6] sm:$0x1]
    %v1693 = vunpack.c.l.b16 %v1564
    %v1694 = vunpack.c.l.b16 %v1565
    %v1695 = vunpack.c.l.b16 %v1566
    %v1696 = vunpack.c.l.b16 %v1567
    %v1697 = vunpack.c.l.b16 %v1568
    %v1698 = vunpack.c.l.b16 %v1569
    %v1699 = vunpack.c.l.b16 %v1570
    %v1700 = vunpack.c.l.b16 %v1571
    %v1701 = vunpack.c.l.b16 %v1572
    %v1702 = vunpack.c.l.b16 %v1573
    %v1703 = vunpack.c.l.b16 %v1574
    %v1704 = vunpack.c.l.b16 %v1575
    %v1705 = vunpack.c.l.b16 %v1576
    %v1706 = vunpack.c.l.b16 %v1577
    %v1707 = vunpack.c.l.b16 %v1578
    %v1708 = vunpack.c.l.b16 %v1579
    %v1709 = vunpack.c.l.b16 %v1580
    %v1710 = vunpack.c.l.b16 %v1581
    %v1711 = vunpack.c.l.b16 %v1582
    %v1712 = vunpack.c.l.b16 %v1583
    %v1713 = vunpack.c.l.b16 %v1584
    %v1714 = vunpack.c.l.b16 %v1585
    %v1715 = vunpack.c.l.b16 %v1586
    %v1716 = vunpack.c.l.b16 %v1587
    %v1717 = vunpack.c.l.b16 %v1588
    %v1718 = vunpack.c.l.b16 %v1589
    %v1719 = vunpack.c.l.b16 %v1590
    %v1720 = vunpack.c.l.b16 %v1591
    %v1721 = vunpack.c.l.b16 %v1592
    %v1722 = vunpack.c.l.b16 %v1593
    %v1723 = vunpack.c.l.b16 %v1594
    %v1724 = vunpack.c.l.b16 %v1595
    %v1725 = vunpack.c.l.b16 %v1596
    %v1726 = vunpack.c.l.b16 %v1597
    %v1727 = vunpack.c.l.b16 %v1598
    %v1728 = vunpack.c.l.b16 %v1599
    %v1729 = vunpack.c.l.b16 %v1600
    %v1730 = vunpack.c.l.b16 %v1601
    %v1731 = vunpack.c.l.b16 %v1602
    %v1732 = vunpack.c.l.b16 %v1603
    %v1733 = vunpack.c.l.b16 %v1604
    %v1734 = vunpack.c.l.b16 %v1605
    %v1735 = vunpack.c.l.b16 %v1606
    %v1736 = vunpack.c.l.b16 %v1607
    %v1737 = vunpack.c.l.b16 %v1608
    %v1738 = vunpack.c.l.b16 %v1609
    %v1739 = vunpack.c.l.b16 %v1610
    %v1740 = vunpack.c.l.b16 %v1611
    %v1741 = vunpack.c.l.b16 %v1612
    %v1742 = vunpack.c.l.b16 %v1613
    %v1743 = vunpack.c.l.b16 %v1614
    %v1744 = vunpack.c.l.b16 %v1615
    %v1745 = vunpack.c.l.b16 %v1616
    %v1746 = vunpack.c.l.b16 %v1617
    %v1747 = vunpack.c.l.b16 %v1618
    %v1748 = vunpack.c.l.b16 %v1619
    %v1749 = vunpack.c.l.b16 %v1620
    %v1750 = vunpack.c.l.b16 %v1621
    %v1751 = vunpack.c.l.b16 %v1622
    %v1752 = vunpack.c.l.b16 %v1623
    %v1753 = vunpack.c.l.b16 %v1624
    %v1754 = vunpack.c.l.b16 %v1625
    %v1755 = vunpack.c.l.b16 %v1626
    %v1756 = vunpack.c.l.b16 %v1627
    %v1757 = vpack.c.b16 %v1694, %v1693
    %v1758 = vpack.c.b16 %v1696, %v1695
    %v1759 = vpack.c.b16 %v1698, %v1697
    %v1760 = vpack.c.b16 %v1700, %v1699
    %v1761 = vpack.c.b16 %v1702, %v1701
    %v1762 = vpack.c.b16 %v1704, %v1703
    %v1763 = vpack.c.b16 %v1706, %v1705
    %v1764 = vpack.c.b16 %v1708, %v1707
    %v1765 = vpack.c.b16 %v1710, %v1709
    %v1766 = vpack.c.b16 %v1712, %v1711
    %v1767 = vpack.c.b16 %v1714, %v1713
    %v1768 = vpack.c.b16 %v1716, %v1715
    %v1769 = vpack.c.b16 %v1718, %v1717
    %v1770 = vpack.c.b16 %v1720, %v1719
    %v1771 = vpack.c.b16 %v1722, %v1721
    %v1772 = vpack.c.b16 %v1724, %v1723
    %v1773 = vpack.c.b16 %v1726, %v1725
    %v1774 = vpack.c.b16 %v1728, %v1727
    %v1775 = vpack.c.b16 %v1730, %v1729
    %v1776 = vpack.c.b16 %v1732, %v1731
    %v1777 = vpack.c.b16 %v1734, %v1733
    %v1778 = vpack.c.b16 %v1736, %v1735
    %v1779 = vpack.c.b16 %v1738, %v1737
    %v1780 = vpack.c.b16 %v1740, %v1739
    %v1781 = vpack.c.b16 %v1742, %v1741
    %v1782 = vpack.c.b16 %v1744, %v1743
    %v1783 = vpack.c.b16 %v1746, %v1745
    %v1784 = vpack.c.b16 %v1748, %v1747
    %v1785 = vpack.c.b16 %v1750, %v1749
    %v1786 = vpack.c.b16 %v1752, %v1751
    %v1787 = vpack.c.b16 %v1754, %v1753
    %v1788 = vpack.c.b16 %v1756, %v1755
    %1821 = vmatprep.subr.bf16.mxu0 0
    %1822 = vmatpush1.bf16.msra.mxu0 %v1764
    %1823 = vmatprep.subr.bf16.mxu0 0
    %1824 = vmatpush1.bf16.msra.mxu0 %v1763
    %1825 = vmatprep.subr.bf16.mxu0 0
    %1826 = vmatpush1.bf16.msra.mxu0 %v1762
    %1827 = vmatprep.subr.bf16.mxu0 0
    %1828 = vmatpush1.bf16.msra.mxu0 %v1761
    %1829 = vmatprep.subr.bf16.mxu0 0
    %1830 = vmatpush1.bf16.msra.mxu0 %v1760
    %1831 = vmatprep.subr.bf16.mxu0 0
    %1832 = vmatpush1.bf16.msra.mxu0 %v1759
    %1833 = vmatprep.subr.bf16.mxu0 0
    %1834 = vmatpush1.bf16.msra.mxu0 %v1758
    %1835 = vmatprep.subr.bf16.mxu0 0
    %1836 = vmatpush1.bf16.msra.mxu0 %v1757
    %1837 = vmatprep.subr.bf16.mxu0 0
    %1838 = vmatpush2.bf16.msra.mxu0 %v1772
    %1839 = vmatprep.subr.bf16.mxu0 0
    %1840 = vmatpush2.bf16.msra.mxu0 %v1771
    %1841 = vmatprep.subr.bf16.mxu0 0
    %1842 = vmatpush2.bf16.msra.mxu0 %v1770
    %1843 = vmatprep.subr.bf16.mxu0 0
    %1844 = vmatpush2.bf16.msra.mxu0 %v1769
    %1845 = vmatprep.subr.bf16.mxu0 0
    %1846 = vmatpush2.bf16.msra.mxu0 %v1768
    %1847 = vmatprep.subr.bf16.mxu0 0
    %1848 = vmatpush2.bf16.msra.mxu0 %v1767
    %1849 = vmatprep.subr.bf16.mxu0 0
    %1850 = vmatpush2.bf16.msra.mxu0 %v1766
    %1851 = vmatprep.subr.bf16.mxu0 0
    %1852 = vmatpush2.bf16.msra.mxu0 %v1765
    %1853 = vmatprep.mubr.bf16.mxu0 %v1561
    %1854 = vmatmul.mubr.bf16.gmra.mxu0 %v1560
    %v1855 = vpop.f32.mrf.mxu0
    %v1856 = vadd.f32 %v1628, %v1855
    %v1857 = vpop.f32.mrf.mxu0
    %v1858 = vpop.f32.mrf.mxu0
    %v1859 = vpop.f32.mrf.mxu0
    %1860 = vdwg.mxu0
    %1861 = vmatprep.subr.bf16.mxu0 0
    %1862 = vmatpush1.bf16.msra.mxu0 %v1780
    %1863 = vmatprep.subr.bf16.mxu0 0
    %1864 = vmatpush1.bf16.msra.mxu0 %v1779
    %1865 = vmatprep.subr.bf16.mxu0 0
    %1866 = vmatpush1.bf16.msra.mxu0 %v1778
    %1867 = vmatprep.subr.bf16.mxu0 0
    %1868 = vmatpush1.bf16.msra.mxu0 %v1777
    %1869 = vmatprep.subr.bf16.mxu0 0
    %1870 = vmatpush1.bf16.msra.mxu0 %v1776
    %1871 = vmatprep.subr.bf16.mxu0 0
    %1872 = vmatpush1.bf16.msra.mxu0 %v1775
    %1873 = vmatprep.subr.bf16.mxu0 0
    %1874 = vmatpush1.bf16.msra.mxu0 %v1774
    %1875 = vmatprep.subr.bf16.mxu0 0
    %1876 = vmatpush1.bf16.msra.mxu0 %v1773
    %1877 = vmatprep.subr.bf16.mxu0 0
    %1878 = vmatpush2.bf16.msra.mxu0 %v1788
    %1879 = vmatprep.subr.bf16.mxu0 0
    %1880 = vmatpush2.bf16.msra.mxu0 %v1787
    %1881 = vmatprep.subr.bf16.mxu0 0
    %1882 = vmatpush2.bf16.msra.mxu0 %v1786
    %1883 = vmatprep.subr.bf16.mxu0 0
    %1884 = vmatpush2.bf16.msra.mxu0 %v1785
    %1885 = vmatprep.subr.bf16.mxu0 0
    %1886 = vmatpush2.bf16.msra.mxu0 %v1784
    %1887 = vmatprep.subr.bf16.mxu0 0
    %1888 = vmatpush2.bf16.msra.mxu0 %v1783
    %1889 = vmatprep.subr.bf16.mxu0 0
    %1890 = vmatpush2.bf16.msra.mxu0 %v1782
    %1891 = vmatprep.subr.bf16.mxu0 0
    %1892 = vmatpush2.bf16.msra.mxu0 %v1781
    %1893 = vmatprep.mubr.bf16.mxu0 %v1563
    %1894 = vmatmul.mubr.bf16.gmra.mxu0 %v1562
    %v1895 = vpop.f32.mrf.mxu0
    %v1896 = vadd.f32 %v1856, %v1895
    %v1897 = vpop.f32.mrf.mxu0
    %v1898 = vpop.f32.mrf.mxu0
    %v1899 = vpop.f32.mrf.mxu0
    %1900 = vdwg.mxu0
    %v1901 = vtanh.pop %v1896
    %v1902 = vmul.f32 %v1901, 2.0
    %v1903 = vpack.c.bf16 %v1902, %v1902
    %vm1904 = vcmask 1040384
    %vm1905 = vsmask.f32 256
    %vm1906 = vmand %vm1904, %vm1905
    %v1907 = vld [vmem:[#allocation11] sm:$0x1]
    %v1908 = vsel %vm1906, %v1903, %v1907
    %1909 = vst [vmem:[#allocation11] sm:$0x1] %v1908
    // Predicated region
    $region50: #{tpu_custom_call.1} parent=1 // pred_check
      _
    $region51: #{tpu_custom_call.1} parent=1 // pred_check_branch
      %1911 = sbr.rel (0) target = $region53
    $region52: #{tpu_custom_call.1} parent=1 // pred_region
      %s1913 = ssub.s32 16, 16
      %1914 = vsyncadd [#allocation4], %s1913
      %s1916 = sshll.u32 [#allocation11], 4
      %s1917 = int_to_ptr.vmem [resolvable:$true] %s1916
      %1919 = dma.vmem_to_hbm [thread:$0]  %s1917, 16, %s7, [#allocation4]
    $region53: #{tpu_custom_call.1} parent=1 // pred_fallthru
      _
    // Predicated region
    $region54: #{tpu_custom_call.1} parent=1 // pred_check
      _
    $region55: #{tpu_custom_call.1} parent=1 // pred_check_branch
      %1921 = sbr.rel (0) target = $region57
    $region56: #{tpu_custom_call.1} parent=1 // pred_region
      %1922 = dma.done [#allocation4], 16
    $region57: #{tpu_custom_call.1} parent=1 // pred_fallthru
      _
    %1923 = vsyncpa [#allocation3], 1
    %1924 = vsyncpa [#allocation6], 1
    %1925 = vsyncpa [#allocation9], 1
    %1926 = vsyncpa [#allocation4], 1

</llo_original>
